<compile_context>
chip_gen: v7x
topology: tpu7x:2x2x1
jax: 0.10.0
libtpu: 0.0.40
codegen_flags: <defaults>
</compile_context>

<pallas_src>
import functools

import jax
import jax.numpy as jnp
from jax.experimental import pallas as pl
from jax.experimental.pallas import tpu as pltpu


# ---------------------------------------------------------------------------
# Fused kernel
# ---------------------------------------------------------------------------
def _im2col(x, kh_taps, kw_taps, ho, wo):
    """x: (tb, hi, wi, c) pre-padded activation -> (tb*ho*wo, kh*kw*c) patch.

    Built with ONE lane-axis concatenate + ONE leading-dim reshape so every conv is a
    single dense MXU matmul with the taps packed into the contraction (K) dimension.
    """
    tb, _, _, c = x.shape
    cols = [x[:, kh:kh + ho, kw:kw + wo, :]
            for kh in range(kh_taps) for kw in range(kw_taps)]
    patch = jnp.concatenate(cols, axis=-1)                 # (tb, ho, wo, kh*kw*c)
    return patch.reshape(tb * ho * wo, kh_taps * kw_taps * c)


def _asdown_kernel(z1_ref, z2_ref, w1_ref, w2_ref, w3_ref,
                   ss12_ref, sh12_ref, s3_ref, sh3_ref,
                   o_ref, yc_ref, *, hs, ws, cmid, cout):
    tb = z1_ref.shape[0]
    ccat = 2 * cmid

    # ---- Branch 1: stride-2 3x3 conv (+bias) rewritten as a 2x2-tap stride-1 conv
    #      over SPD(pad(x)); K = 16*c1 (=128 for c1=8) -> one MXU matmul.
    patch1 = _im2col(z1_ref[...], 2, 2, hs, ws)            # (P, 16*c1)
    y1 = jnp.dot(patch1, w1_ref[...], preferred_element_type=jnp.float32)

    # ---- Branch 2: SPDConv 3x3 conv; K = 36*c1 -> one MXU matmul.
    patch2 = _im2col(z2_ref[...], 3, 3, hs, ws)            # (P, 36*c1)
    y2 = jnp.dot(patch2, w2_ref[...], preferred_element_type=jnp.float32)

    # ---- Merged epilogue on the channel concat [y1 | y2] (single, wider VPU pass):
    #      y1 channels get the conv bias only; y2 channels get folded BN + SiLU.
    y12 = jnp.concatenate([y1, y2], axis=-1) * ss12_ref[...] + sh12_ref[...]
    ch = jax.lax.broadcasted_iota(jnp.int32, y12.shape, 1)
    y12 = jnp.where(ch >= cmid, y12 * jax.nn.sigmoid(y12), y12)

    # ---- Keep the concat resident in VMEM (zero-padded for the fuse conv):
    #      no HBM round trip for y1 / y2 / cat.
    yc_ref[...] = jnp.zeros_like(yc_ref)
    yc_ref[:, 1:1 + hs, 1:1 + ws, :] = y12.reshape(tb, hs, ws, ccat)

    # ---- Fuse conv: 3x3 over the VMEM-resident concat, folded BN + SiLU.
    patch3 = _im2col(yc_ref[...], 3, 3, hs, ws)            # (P, 9*ccat)
    y3 = jnp.dot(patch3, w3_ref[...], preferred_element_type=jnp.float32)
    y3 = y3 * s3_ref[...] + sh3_ref[...]
    y3 = y3 * jax.nn.sigmoid(y3)
    # TODO(synk): fold (ws, cout) into a single lane-dense last dim for unmasked vst
    # once the sublane->lane reshape is confirmed supported on all targets.
    o_ref[...] = y3.reshape(tb, hs, ws, cout).astype(o_ref.dtype)


# ---------------------------------------------------------------------------
# Wrapper-side layout plumbing (one pre-pass over the input) + weight packing.
# ---------------------------------------------------------------------------
def _space_to_depth_nhwc(x):
    # Matches torch.cat([x[...,::2,::2], x[...,1::2,::2], x[...,::2,1::2], x[...,1::2,1::2]], 1)
    return jnp.concatenate(
        [x[:, 0::2, 0::2, :], x[:, 1::2, 0::2, :], x[:, 0::2, 1::2, :], x[:, 1::2, 1::2, :]],
        axis=-1)


def _pack_w1(w):
    """(2c1, c1, 3, 3) stride-2 weight -> (16*c1, 2c1): 2x2 taps over SPD(pad(x)),
    taps packed along the contraction axis in the same order as _im2col."""
    wp = jnp.pad(w, ((0, 0), (0, 0), (0, 1), (0, 1)))      # extend taps to 4x4 with zeros
    spd = [(0, 0), (1, 0), (0, 1), (1, 1)]                  # SPD channel-block order (r, s)
    rows = []
    for a in range(2):                                       # tap kh
        for b in range(2):                                   # tap kw
            for (r, s) in spd:
                rows.append(wp[:, :, 2 * a + r, 2 * b + s].T)   # (c1, 2c1)
    return jnp.concatenate(rows, axis=0)                     # (16*c1, 2c1)


def _pack_w_3x3(w):
    """(cout, cin, 3, 3) -> (9*cin, cout), taps packed along K (kh-major, kw-minor)."""
    rows = [w[:, :, kh, kw].T for kh in range(3) for kw in range(3)]
    return jnp.concatenate(rows, axis=0)


def _bn_scale_shift(gamma, beta, mean, var, eps=1e-5):
    scale = gamma / jnp.sqrt(var + eps)
    return scale, beta - mean * scale


def _pick_batch_tile(batch, per_item_bytes, target_bytes):
    """Largest divisor of `batch` whose per-step footprint stays under `target_bytes`.
    No forced '>=2 grid steps' (per review); falls back to 1 if a single item is big."""
    tb = 1
    for cand in range(1, batch + 1):
        if batch % cand == 0 and cand * per_item_bytes <= target_bytes:
            tb = cand
    return tb


@jax.jit
def asdownsample_pallas(x, params):
    """x: (B, c1, H, W) NCHW float32 -> (B, c2, H/2, W/2)."""
    b, c1, h, w = x.shape
    assert h % 2 == 0 and w % 2 == 0, "ASDownSample requires even spatial dims (SPD)"
    hs, ws = h // 2, w // 2
    cin_spd, cmid = 4 * c1, 2 * c1
    ccat = 2 * cmid
    c2 = params["w_c1"].shape[0]

    xh = jnp.transpose(x, (0, 2, 3, 1)).astype(jnp.float32)          # NHWC

    # Single layout pre-pass over the (small) input; all conv FLOPs and all
    # intermediates stay inside one pallas_call.
    z1 = _space_to_depth_nhwc(jnp.pad(xh, ((0, 0), (1, 1), (1, 1), (0, 0))))   # (B,hs+1,ws+1,4c1)
    z2 = jnp.pad(_space_to_depth_nhwc(xh), ((0, 0), (1, 1), (1, 1), (0, 0)))   # (B,hs+2,ws+2,4c1)

    # Tap-packed weights + folded epilogue vectors.
    w1 = _pack_w1(params["w_a1"]).astype(jnp.float32)                 # (16*c1, 2c1)
    w2 = _pack_w_3x3(params["w_a2"]).astype(jnp.float32)              # (36*c1, 2c1)
    w3 = _pack_w_3x3(params["w_c1"]).astype(jnp.float32)              # (36*c1, c2)
    s2, sh2 = _bn_scale_shift(params["g_a2"], params["be_a2"], params["m_a2"], params["v_a2"])
    s3, sh3 = _bn_scale_shift(params["g_c1"], params["be_c1"], params["m_c1"], params["v_c1"])
    ss12 = jnp.concatenate([jnp.ones((cmid,), jnp.float32), s2]).reshape(1, ccat)
    sh12 = jnp.concatenate([params["b_a1"].astype(jnp.float32), sh2]).reshape(1, ccat)
    s3r, sh3r = s3.reshape(1, c2), sh3.reshape(1, c2)

    # VMEM budgeting (v7x-safe: 64 MiB physical; v5e/v6e have 128 MiB headroom).
    per_item = 4 * (
        2 * ((hs + 1) * (ws + 1) * cin_spd                    # z1, double-buffered
             + (hs + 2) * (ws + 2) * cin_spd                  # z2, double-buffered
             + hs * ws * c2)                                  # out, double-buffered
        + (hs + 2) * (ws + 2) * ccat                          # VMEM concat scratch
        + hs * ws * (4 + 9 + 9) * cin_spd)                    # im2col patches
    tb = _pick_batch_tile(b, per_item, target_bytes=4 * 1024 * 1024)

    kernel = functools.partial(_asdown_kernel, hs=hs, ws=ws, cmid=cmid, cout=c2)

    out = pl.pallas_call(
        kernel,
        out_shape=jax.ShapeDtypeStruct((b, hs, ws, c2), jnp.float32),
        grid=(b // tb,),
        in_specs=[
            pl.BlockSpec((tb, hs + 1, ws + 1, cin_spd), lambda i: (i, 0, 0, 0)),
            pl.BlockSpec((tb, hs + 2, ws + 2, cin_spd), lambda i: (i, 0, 0, 0)),
            pl.BlockSpec((4 * cin_spd, cmid), lambda i: (0, 0)),
            pl.BlockSpec((9 * cin_spd, cmid), lambda i: (0, 0)),
            pl.BlockSpec((9 * ccat, c2), lambda i: (0, 0)),
            pl.BlockSpec((1, ccat), lambda i: (0, 0)),
            pl.BlockSpec((1, ccat), lambda i: (0, 0)),
            pl.BlockSpec((1, c2), lambda i: (0, 0)),
            pl.BlockSpec((1, c2), lambda i: (0, 0)),
        ],
        out_specs=pl.BlockSpec((tb, hs, ws, c2), lambda i: (i, 0, 0, 0)),
        scratch_shapes=[pltpu.VMEM((tb, hs + 2, ws + 2, ccat), jnp.float32)],
        compiler_params=pltpu.CompilerParams(
            # Grid steps are independent batch tiles; on v7x, pltpu.CORE_PARALLEL can
            # split them across the 2 TensorCores once tiles are big enough.
            dimension_semantics=("arbitrary",),
            vmem_limit_bytes=48 * 1024 * 1024,
        ),
    )(z1, z2, w1, w2, w3, ss12, sh12, s3r, sh3r)

    return jnp.transpose(out, (0, 3, 1, 2))                           # back to NCHW


# ---------------------------------------------------------------------------
# Pure-JAX reference mirroring the PyTorch forward (eval-mode BN).
# ---------------------------------------------------------------------------
def _conv2d(x, w, bias=None, stride=1, padding=1):
    out = jax.lax.conv_general_dilated(
        x, w, (stride, stride), [(padding, padding), (padding, padding)],
        dimension_numbers=("NCHW", "OIHW", "NCHW"),
        precision=jax.lax.Precision.HIGHEST)
    if bias is not None:
        out = out + bias[None, :, None, None]
    return out


def _bn_silu(x, gamma, beta, mean, var, eps=1e-5):
    scale = gamma / jnp.sqrt(var + eps)
    y = x * scale[None, :, None, None] + (beta - mean * scale)[None, :, None, None]
    return y * jax.nn.sigmoid(y)


def asdownsample_reference(x, p):
    y1 = _conv2d(x, p["w_a1"], p["b_a1"], stride=2, padding=1)
    spd = jnp.concatenate(
        [x[..., ::2, ::2], x[..., 1::2, ::2], x[..., ::2, 1::2], x[..., 1::2, 1::2]], axis=1)
    y2 = _bn_silu(_conv2d(spd, p["w_a2"], None, 1, 1),
                  p["g_a2"], p["be_a2"], p["m_a2"], p["v_a2"])
    y = jnp.concatenate([y1, y2], axis=1)
    return _bn_silu(_conv2d(y, p["w_c1"], None, 1, 1),
                    p["g_c1"], p["be_c1"], p["m_c1"], p["v_c1"])


if __name__ == "__main__":
    B, C1, C2, H, W = 2, 8, 16, 16, 16       # ASDownSample(c1=8, c2=16); x: (2, 8, 16, 16)
    key = jax.random.PRNGKey(0)
    ks = jax.random.split(key, 13)

    x = jax.random.normal(ks[0], (B, C1, H, W), dtype=jnp.float32)

    params = {
        # astrous_conv1: Conv2d(c1, 2*c1, 3, 2, padding=1, bias=True)
        "w_a1": 0.1 * jax.random.normal(ks[1], (2 * C1, C1, 3, 3), jnp.float32),
        "b_a1": 0.1 * jax.random.normal(ks[2], (2 * C1,), jnp.float32),
        # SPDConv.conv: Conv2d(4*c1, 2*c1, 3, 1, padding=1, bias=False) + BN + SiLU
        "w_a2": 0.1 * jax.random.normal(ks[3], (2 * C1, 4 * C1, 3, 3), jnp.float32),
        "g_a2": 1.0 + 0.1 * jax.random.normal(ks[4], (2 * C1,), jnp.float32),
        "be_a2": 0.1 * jax.random.normal(ks[5], (2 * C1,), jnp.float32),
        "m_a2": 0.1 * jax.random.normal(ks[6], (2 * C1,), jnp.float32),
        "v_a2": 0.5 + jax.random.uniform(ks[7], (2 * C1,), jnp.float32),
        # conv1: Conv2d(4*c1, c2, 3, 1, padding=1, bias=False) + BN + SiLU
        "w_c1": 0.1 * jax.random.normal(ks[8], (C2, 4 * C1, 3, 3), jnp.float32),
        "g_c1": 1.0 + 0.1 * jax.random.normal(ks[9], (C2,), jnp.float32),
        "be_c1": 0.1 * jax.random.normal(ks[10], (C2,), jnp.float32),
        "m_c1": 0.1 * jax.random.normal(ks[11], (C2,), jnp.float32),
        "v_c1": 0.5 + jax.random.uniform(ks[12], (C2,), jnp.float32),
    }

    out = jax.block_until_ready(asdownsample_pallas(x, params))
    ref = jax.block_until_ready(asdownsample_reference(x, params))

    assert out.shape == (B, C2, H // 2, W // 2), out.shape
    err = float(jnp.max(jnp.abs(out - ref)))
    assert jnp.allclose(out, ref, atol=1e-3, rtol=1e-3), err
    print("KERNEL_OK")
</pallas_src>

<mosaic_0001>
module attributes {stable_mosaic.version = 11 : i64} {
  func.func @_asdown_kernel(%arg0: i32, %arg1: memref<2x9x9x32xf32, #tpu.memory_space<vmem>>, %arg2: memref<2x10x10x32xf32, #tpu.memory_space<vmem>>, %arg3: memref<128x16xf32, #tpu.memory_space<vmem>>, %arg4: memref<288x16xf32, #tpu.memory_space<vmem>>, %arg5: memref<288x16xf32, #tpu.memory_space<vmem>>, %arg6: memref<1x32xf32, #tpu.memory_space<vmem>>, %arg7: memref<1x32xf32, #tpu.memory_space<vmem>>, %arg8: memref<1x16xf32, #tpu.memory_space<vmem>>, %arg9: memref<1x16xf32, #tpu.memory_space<vmem>>, %arg10: memref<2x8x8x16xf32, #tpu.memory_space<vmem>>, %arg11: memref<2x10x10x32xf32, #tpu.memory_space<vmem>>) attributes {dimension_semantics = [#tpu.dimension_semantics<arbitrary>], iteration_bounds = array<i64: 1>, scalar_prefetch = 0 : i64, scratch_operands = 1 : i64, tpu.core_type = #tpu.core_type<tc>, window_params = [{transform_indices = @transform_0, window_bounds = array<i64: 2, 9, 9, 32>}, {transform_indices = @transform_1, window_bounds = array<i64: 2, 10, 10, 32>}, {pipeline_mode = #tpu.pipeline_mode<synchronous>, transform_indices = @transform_2, window_bounds = array<i64: 128, 16>}, {pipeline_mode = #tpu.pipeline_mode<synchronous>, transform_indices = @transform_3, window_bounds = array<i64: 288, 16>}, {pipeline_mode = #tpu.pipeline_mode<synchronous>, transform_indices = @transform_4, window_bounds = array<i64: 288, 16>}, {pipeline_mode = #tpu.pipeline_mode<synchronous>, transform_indices = @transform_5, window_bounds = array<i64: 1, 32>}, {pipeline_mode = #tpu.pipeline_mode<synchronous>, transform_indices = @transform_6, window_bounds = array<i64: 1, 32>}, {pipeline_mode = #tpu.pipeline_mode<synchronous>, transform_indices = @transform_7, window_bounds = array<i64: 1, 16>}, {pipeline_mode = #tpu.pipeline_mode<synchronous>, transform_indices = @transform_8, window_bounds = array<i64: 1, 16>}, {transform_indices = @transform_9, window_bounds = array<i64: 2, 8, 8, 16>}]} {
    %c0 = arith.constant 0 : index
    %c0_0 = arith.constant 0 : index
    %c0_1 = arith.constant 0 : index
    %c0_2 = arith.constant 0 : index
    %0 = vector.load %arg1[%c0, %c0_0, %c0_1, %c0_2] : memref<2x9x9x32xf32, #tpu.memory_space<vmem>>, vector<2x9x9x32xf32>
    %1 = vector.extract_strided_slice %0 {offsets = [0, 0, 0, 0], sizes = [2, 8, 8, 32], strides = [1, 1, 1, 1]} : vector<2x9x9x32xf32> to vector<2x8x8x32xf32>
    %2 = vector.extract_strided_slice %0 {offsets = [0, 0, 1, 0], sizes = [2, 8, 8, 32], strides = [1, 1, 1, 1]} : vector<2x9x9x32xf32> to vector<2x8x8x32xf32>
    %3 = vector.extract_strided_slice %0 {offsets = [0, 1, 0, 0], sizes = [2, 8, 8, 32], strides = [1, 1, 1, 1]} : vector<2x9x9x32xf32> to vector<2x8x8x32xf32>
    %4 = vector.extract_strided_slice %0 {offsets = [0, 1, 1, 0], sizes = [2, 8, 8, 32], strides = [1, 1, 1, 1]} : vector<2x9x9x32xf32> to vector<2x8x8x32xf32>
    %5 = tpu.concatenate %1, %2, %3, %4 in 3 : vector<2x8x8x32xf32>, vector<2x8x8x32xf32>, vector<2x8x8x32xf32>, vector<2x8x8x32xf32> -> vector<2x8x8x128xf32>
    %6 = vector.shape_cast %5 : vector<2x8x8x128xf32> to vector<128x128xf32>
    %c0_3 = arith.constant 0 : index
    %c0_4 = arith.constant 0 : index
    %7 = vector.load %arg3[%c0_3, %c0_4] : memref<128x16xf32, #tpu.memory_space<vmem>>, vector<128x16xf32>
    %cst = arith.constant dense<0.000000e+00> : vector<128x16xf32>
    %8 = tpu.matmul %6, %7, %cst {dimension_numbers = #tpu.dot_dimension_numbers<[1], [0], [0], [1], [0, 0, 1, 1], [], []>} : vector<128x128xf32>, vector<128x16xf32>, vector<128x16xf32> -> vector<128x16xf32>
    %c0_5 = arith.constant 0 : index
    %c0_6 = arith.constant 0 : index
    %c0_7 = arith.constant 0 : index
    %c0_8 = arith.constant 0 : index
    %9 = vector.load %arg2[%c0_5, %c0_6, %c0_7, %c0_8] : memref<2x10x10x32xf32, #tpu.memory_space<vmem>>, vector<2x10x10x32xf32>
    %10 = vector.extract_strided_slice %9 {offsets = [0, 0, 0, 0], sizes = [2, 8, 8, 32], strides = [1, 1, 1, 1]} : vector<2x10x10x32xf32> to vector<2x8x8x32xf32>
    %11 = vector.extract_strided_slice %9 {offsets = [0, 0, 1, 0], sizes = [2, 8, 8, 32], strides = [1, 1, 1, 1]} : vector<2x10x10x32xf32> to vector<2x8x8x32xf32>
    %12 = vector.extract_strided_slice %9 {offsets = [0, 0, 2, 0], sizes = [2, 8, 8, 32], strides = [1, 1, 1, 1]} : vector<2x10x10x32xf32> to vector<2x8x8x32xf32>
    %13 = vector.extract_strided_slice %9 {offsets = [0, 1, 0, 0], sizes = [2, 8, 8, 32], strides = [1, 1, 1, 1]} : vector<2x10x10x32xf32> to vector<2x8x8x32xf32>
    %14 = vector.extract_strided_slice %9 {offsets = [0, 1, 1, 0], sizes = [2, 8, 8, 32], strides = [1, 1, 1, 1]} : vector<2x10x10x32xf32> to vector<2x8x8x32xf32>
    %15 = vector.extract_strided_slice %9 {offsets = [0, 1, 2, 0], sizes = [2, 8, 8, 32], strides = [1, 1, 1, 1]} : vector<2x10x10x32xf32> to vector<2x8x8x32xf32>
    %16 = vector.extract_strided_slice %9 {offsets = [0, 2, 0, 0], sizes = [2, 8, 8, 32], strides = [1, 1, 1, 1]} : vector<2x10x10x32xf32> to vector<2x8x8x32xf32>
    %17 = vector.extract_strided_slice %9 {offsets = [0, 2, 1, 0], sizes = [2, 8, 8, 32], strides = [1, 1, 1, 1]} : vector<2x10x10x32xf32> to vector<2x8x8x32xf32>
    %18 = vector.extract_strided_slice %9 {offsets = [0, 2, 2, 0], sizes = [2, 8, 8, 32], strides = [1, 1, 1, 1]} : vector<2x10x10x32xf32> to vector<2x8x8x32xf32>
    %19 = tpu.concatenate %10, %11, %12, %13, %14, %15, %16, %17, %18 in 3 : vector<2x8x8x32xf32>, vector<2x8x8x32xf32>, vector<2x8x8x32xf32>, vector<2x8x8x32xf32>, vector<2x8x8x32xf32>, vector<2x8x8x32xf32>, vector<2x8x8x32xf32>, vector<2x8x8x32xf32>, vector<2x8x8x32xf32> -> vector<2x8x8x288xf32>
    %20 = vector.shape_cast %19 : vector<2x8x8x288xf32> to vector<128x288xf32>
    %c0_9 = arith.constant 0 : index
    %c0_10 = arith.constant 0 : index
    %21 = vector.load %arg4[%c0_9, %c0_10] : memref<288x16xf32, #tpu.memory_space<vmem>>, vector<288x16xf32>
    %cst_11 = arith.constant dense<0.000000e+00> : vector<128x16xf32>
    %22 = tpu.matmul %20, %21, %cst_11 {dimension_numbers = #tpu.dot_dimension_numbers<[1], [0], [0], [1], [0, 0, 1, 1], [], []>} : vector<128x288xf32>, vector<288x16xf32>, vector<128x16xf32> -> vector<128x16xf32>
    %23 = tpu.concatenate %8, %22 in 1 : vector<128x16xf32>, vector<128x16xf32> -> vector<128x32xf32>
    %c0_12 = arith.constant 0 : index
    %c0_13 = arith.constant 0 : index
    %24 = vector.load %arg6[%c0_12, %c0_13] : memref<1x32xf32, #tpu.memory_space<vmem>>, vector<1x32xf32>
    %25 = vector.broadcast %24 : vector<1x32xf32> to vector<128x32xf32>
    %26 = arith.mulf %23, %25 : vector<128x32xf32>
    %c0_14 = arith.constant 0 : index
    %c0_15 = arith.constant 0 : index
    %27 = vector.load %arg7[%c0_14, %c0_15] : memref<1x32xf32, #tpu.memory_space<vmem>>, vector<1x32xf32>
    %28 = vector.broadcast %27 : vector<1x32xf32> to vector<128x32xf32>
    %29 = arith.addf %26, %28 : vector<128x32xf32>
    %30 = tpu.iota {dimensions = array<i32: 1>} : vector<128x32xi32>
    %c16_i32 = arith.constant 16 : i32
    %31 = vector.broadcast %c16_i32 : i32 to vector<128x32xi32>
    %32 = arith.cmpi sge, %30, %31 : vector<128x32xi32>
    %33 = arith.negf %29 : vector<128x32xf32>
    %34 = math.exp %33 : vector<128x32xf32>
    %cst_16 = arith.constant 1.000000e+00 : f32
    %35 = vector.broadcast %cst_16 : f32 to vector<128x32xf32>
    %36 = arith.addf %35, %34 : vector<128x32xf32>
    %37 = arith.divf %35, %36 : vector<128x32xf32>
    %38 = arith.mulf %29, %37 : vector<128x32xf32>
    %39 = arith.select %32, %38, %29 : vector<128x32xi1>, vector<128x32xf32>
    %cst_17 = arith.constant 0.000000e+00 : f32
    %40 = vector.broadcast %cst_17 : f32 to vector<2x10x10x32xf32>
    %c0_18 = arith.constant 0 : index
    %c0_19 = arith.constant 0 : index
    %c0_20 = arith.constant 0 : index
    %c0_21 = arith.constant 0 : index
    %41 = vector.load %arg11[%c0_18, %c0_19, %c0_20, %c0_21] : memref<2x10x10x32xf32, #tpu.memory_space<vmem>>, vector<2x10x10x32xf32>
    tpu.vector_store %arg11[%c0_18, %c0_19, %c0_20, %c0_21], %40 {strides = array<i32>} : memref<2x10x10x32xf32, #tpu.memory_space<vmem>>, vector<2x10x10x32xf32>,
    %42 = vector.shape_cast %39 : vector<128x32xf32> to vector<2x8x8x32xf32>
    %c0_22 = arith.constant 0 : index
    %c1 = arith.constant 1 : index
    %c1_23 = arith.constant 1 : index
    %c0_24 = arith.constant 0 : index
    %43 = vector.load %arg11[%c0_22, %c1, %c1_23, %c0_24] : memref<2x10x10x32xf32, #tpu.memory_space<vmem>>, vector<2x8x8x32xf32>
    tpu.vector_store %arg11[%c0_22, %c1, %c1_23, %c0_24], %42 {strides = array<i32>} : memref<2x10x10x32xf32, #tpu.memory_space<vmem>>, vector<2x8x8x32xf32>,
    %c0_25 = arith.constant 0 : index
    %c0_26 = arith.constant 0 : index
    %c0_27 = arith.constant 0 : index
    %c0_28 = arith.constant 0 : index
    %44 = vector.load %arg11[%c0_25, %c0_26, %c0_27, %c0_28] : memref<2x10x10x32xf32, #tpu.memory_space<vmem>>, vector<2x10x10x32xf32>
    %45 = vector.extract_strided_slice %44 {offsets = [0, 0, 0, 0], sizes = [2, 8, 8, 32], strides = [1, 1, 1, 1]} : vector<2x10x10x32xf32> to vector<2x8x8x32xf32>
    %46 = vector.extract_strided_slice %44 {offsets = [0, 0, 1, 0], sizes = [2, 8, 8, 32], strides = [1, 1, 1, 1]} : vector<2x10x10x32xf32> to vector<2x8x8x32xf32>
    %47 = vector.extract_strided_slice %44 {offsets = [0, 0, 2, 0], sizes = [2, 8, 8, 32], strides = [1, 1, 1, 1]} : vector<2x10x10x32xf32> to vector<2x8x8x32xf32>
    %48 = vector.extract_strided_slice %44 {offsets = [0, 1, 0, 0], sizes = [2, 8, 8, 32], strides = [1, 1, 1, 1]} : vector<2x10x10x32xf32> to vector<2x8x8x32xf32>
    %49 = vector.extract_strided_slice %44 {offsets = [0, 1, 1, 0], sizes = [2, 8, 8, 32], strides = [1, 1, 1, 1]} : vector<2x10x10x32xf32> to vector<2x8x8x32xf32>
    %50 = vector.extract_strided_slice %44 {offsets = [0, 1, 2, 0], sizes = [2, 8, 8, 32], strides = [1, 1, 1, 1]} : vector<2x10x10x32xf32> to vector<2x8x8x32xf32>
    %51 = vector.extract_strided_slice %44 {offsets = [0, 2, 0, 0], sizes = [2, 8, 8, 32], strides = [1, 1, 1, 1]} : vector<2x10x10x32xf32> to vector<2x8x8x32xf32>
    %52 = vector.extract_strided_slice %44 {offsets = [0, 2, 1, 0], sizes = [2, 8, 8, 32], strides = [1, 1, 1, 1]} : vector<2x10x10x32xf32> to vector<2x8x8x32xf32>
    %53 = vector.extract_strided_slice %44 {offsets = [0, 2, 2, 0], sizes = [2, 8, 8, 32], strides = [1, 1, 1, 1]} : vector<2x10x10x32xf32> to vector<2x8x8x32xf32>
    %54 = tpu.concatenate %45, %46, %47, %48, %49, %50, %51, %52, %53 in 3 : vector<2x8x8x32xf32>, vector<2x8x8x32xf32>, vector<2x8x8x32xf32>, vector<2x8x8x32xf32>, vector<2x8x8x32xf32>, vector<2x8x8x32xf32>, vector<2x8x8x32xf32>, vector<2x8x8x32xf32>, vector<2x8x8x32xf32> -> vector<2x8x8x288xf32>
    %55 = vector.shape_cast %54 : vector<2x8x8x288xf32> to vector<128x288xf32>
    %c0_29 = arith.constant 0 : index
    %c0_30 = arith.constant 0 : index
    %56 = vector.load %arg5[%c0_29, %c0_30] : memref<288x16xf32, #tpu.memory_space<vmem>>, vector<288x16xf32>
    %cst_31 = arith.constant dense<0.000000e+00> : vector<128x16xf32>
    %57 = tpu.matmul %55, %56, %cst_31 {dimension_numbers = #tpu.dot_dimension_numbers<[1], [0], [0], [1], [0, 0, 1, 1], [], []>} : vector<128x288xf32>, vector<288x16xf32>, vector<128x16xf32> -> vector<128x16xf32>
    %c0_32 = arith.constant 0 : index
    %c0_33 = arith.constant 0 : index
    %58 = vector.load %arg8[%c0_32, %c0_33] : memref<1x16xf32, #tpu.memory_space<vmem>>, vector<1x16xf32>
    %59 = vector.broadcast %58 : vector<1x16xf32> to vector<128x16xf32>
    %60 = arith.mulf %57, %59 : vector<128x16xf32>
    %c0_34 = arith.constant 0 : index
    %c0_35 = arith.constant 0 : index
    %61 = vector.load %arg9[%c0_34, %c0_35] : memref<1x16xf32, #tpu.memory_space<vmem>>, vector<1x16xf32>
    %62 = vector.broadcast %61 : vector<1x16xf32> to vector<128x16xf32>
    %63 = arith.addf %60, %62 : vector<128x16xf32>
    %64 = arith.negf %63 : vector<128x16xf32>
    %65 = math.exp %64 : vector<128x16xf32>
    %cst_36 = arith.constant 1.000000e+00 : f32
    %66 = vector.broadcast %cst_36 : f32 to vector<128x16xf32>
    %67 = arith.addf %66, %65 : vector<128x16xf32>
    %68 = arith.divf %66, %67 : vector<128x16xf32>
    %69 = arith.mulf %63, %68 : vector<128x16xf32>
    %70 = vector.shape_cast %69 : vector<128x16xf32> to vector<2x8x8x16xf32>
    %c0_37 = arith.constant 0 : index
    %c0_38 = arith.constant 0 : index
    %c0_39 = arith.constant 0 : index
    %c0_40 = arith.constant 0 : index
    %71 = vector.load %arg10[%c0_37, %c0_38, %c0_39, %c0_40] : memref<2x8x8x16xf32, #tpu.memory_space<vmem>>, vector<2x8x8x16xf32>
    tpu.vector_store %arg10[%c0_37, %c0_38, %c0_39, %c0_40], %70 {strides = array<i32>} : memref<2x8x8x16xf32, #tpu.memory_space<vmem>>, vector<2x8x8x16xf32>,
    return
  }
  func.func @transform_0(%arg0: i32) -> (i32, i32, i32, i32) {
    %c0_i32 = arith.constant 0 : i32
    %c0_i32_0 = arith.constant 0 : i32
    %c0_i32_1 = arith.constant 0 : i32
    %c0_i32_2 = arith.constant 0 : i32
    return %arg0, %c0_i32, %c0_i32_0, %c0_i32_1 : i32, i32, i32, i32
  }
  func.func @transform_1(%arg0: i32) -> (i32, i32, i32, i32) {
    %c0_i32 = arith.constant 0 : i32
    %c0_i32_0 = arith.constant 0 : i32
    %c0_i32_1 = arith.constant 0 : i32
    %c0_i32_2 = arith.constant 0 : i32
    return %arg0, %c0_i32, %c0_i32_0, %c0_i32_1 : i32, i32, i32, i32
  }
  func.func @transform_2(%arg0: i32) -> (i32, i32) {
    %c0_i32 = arith.constant 0 : i32
    %c0_i32_0 = arith.constant 0 : i32
    %c0_i32_1 = arith.constant 0 : i32
    return %c0_i32, %c0_i32_0 : i32, i32
  }
  func.func @transform_3(%arg0: i32) -> (i32, i32) {
    %c0_i32 = arith.constant 0 : i32
    %c0_i32_0 = arith.constant 0 : i32
    %c0_i32_1 = arith.constant 0 : i32
    return %c0_i32, %c0_i32_0 : i32, i32
  }
  func.func @transform_4(%arg0: i32) -> (i32, i32) {
    %c0_i32 = arith.constant 0 : i32
    %c0_i32_0 = arith.constant 0 : i32
    %c0_i32_1 = arith.constant 0 : i32
    return %c0_i32, %c0_i32_0 : i32, i32
  }
  func.func @transform_5(%arg0: i32) -> (i32, i32) {
    %c0_i32 = arith.constant 0 : i32
    %c0_i32_0 = arith.constant 0 : i32
    %c0_i32_1 = arith.constant 0 : i32
    return %c0_i32, %c0_i32_0 : i32, i32
  }
  func.func @transform_6(%arg0: i32) -> (i32, i32) {
    %c0_i32 = arith.constant 0 : i32
    %c0_i32_0 = arith.constant 0 : i32
    %c0_i32_1 = arith.constant 0 : i32
    return %c0_i32, %c0_i32_0 : i32, i32
  }
  func.func @transform_7(%arg0: i32) -> (i32, i32) {
    %c0_i32 = arith.constant 0 : i32
    %c0_i32_0 = arith.constant 0 : i32
    %c0_i32_1 = arith.constant 0 : i32
    return %c0_i32, %c0_i32_0 : i32, i32
  }
  func.func @transform_8(%arg0: i32) -> (i32, i32) {
    %c0_i32 = arith.constant 0 : i32
    %c0_i32_0 = arith.constant 0 : i32
    %c0_i32_1 = arith.constant 0 : i32
    return %c0_i32, %c0_i32_0 : i32, i32
  }
  func.func @transform_9(%arg0: i32) -> (i32, i32, i32, i32) {
    %c0_i32 = arith.constant 0 : i32
    %c0_i32_0 = arith.constant 0 : i32
    %c0_i32_1 = arith.constant 0 : i32
    %c0_i32_2 = arith.constant 0 : i32
    return %arg0, %c0_i32, %c0_i32_0, %c0_i32_1 : i32, i32, i32, i32
  }
}

</mosaic_0001>

<llo_original>
// kernel: asdownsample_pallas.1
$region0: #{asdownsample_pallas.1}
  #allocation0 [shape = 'u32[]', space=smem, size = 0x4, offset = 0x4, fixed_abs, tag = 'smem constant byte address 0x4 - core index']
  #allocation1 [shape = 'u32[144,128]{1,0:T(1,128)}', space=vmem, size = 0x12000, scoped, tag = 'internal scratch']
  #allocation2 [shape = 'f32[2,10,10,32]{3,2,1,0:T(8,128)}', space=vmem, size = 0x28000, scoped, tag = 'scratch operand']
  %s0 = inlined_call_operand.vmem [shape: f32[2,9,9,32], index: 0, kind: input, shape index: {}]
  %s1 = inlined_call_operand.vmem [shape: f32[2,10,10,32], index: 1, kind: input, shape index: {}]
  %s2 = inlined_call_operand.vmem [shape: f32[128,16], index: 2, kind: input, shape index: {}]
  %s3 = inlined_call_operand.vmem [shape: f32[288,16], index: 3, kind: input, shape index: {}]
  %s4 = inlined_call_operand.vmem [shape: f32[288,16], index: 4, kind: input, shape index: {}]
  %s5 = inlined_call_operand.vmem [shape: f32[1,32], index: 5, kind: input, shape index: {}]
  %s6 = inlined_call_operand.vmem [shape: f32[1,32], index: 6, kind: input, shape index: {}]
  %s7 = inlined_call_operand.vmem [shape: f32[1,16], index: 7, kind: input, shape index: {}]
  %s8 = inlined_call_operand.vmem [shape: f32[1,16], index: 8, kind: input, shape index: {}]
  %s9 = inlined_call_operand.hbm [shape: f32[2,8,8,16], index: 9, kind: output, shape index: {}]
  %s10 = sld [smem:[#allocation0]]
  $region46: #{asdownsample_pallas.1} parent=0
    _
  %s12 = ssub.s32 1, %s10
  %s13 = scalar_select 0, %s12, %s10
  $region1: #{asdownsample_pallas.1} parent=0
    #allocation3 [shape = 'u8[65536]{0}', space=vmem, size = 0x10000, scoped, tag = 'output window, operand 0, single buffered']
    #allocation4 [shape = 's32[1]{0}', space=sflag, size = 0x4, scoped, tag = 'scoped memory for asdownsample_pallas.1']
    %14 = vsyncpa [#allocation4], 0
    // Predicated region
    $region2: #{asdownsample_pallas.1} parent=1 // pred_check
      _
    $region3: #{asdownsample_pallas.1} parent=1 // pred_check_branch
      %16 = sbr.rel (0) target = $region5
    $region4: #{asdownsample_pallas.1} parent=1 // pred_region
      _
    $region5: #{asdownsample_pallas.1} parent=1 // pred_fallthru
      _
    // Predicated region
    $region6: #{asdownsample_pallas.1} parent=1 // pred_check
      _
    $region7: #{asdownsample_pallas.1} parent=1 // pred_check_branch
      %18 = sbr.rel (0) target = $region9
    $region8: #{asdownsample_pallas.1} parent=1 // pred_region
      _
    $region9: #{asdownsample_pallas.1} parent=1 // pred_fallthru
      _
    // Predicated region
    $region10: #{asdownsample_pallas.1} parent=1 // pred_check
      _
    $region11: #{asdownsample_pallas.1} parent=1 // pred_check_branch
      %20 = sbr.rel (0) target = $region13
    $region12: #{asdownsample_pallas.1} parent=1 // pred_region
      _
    $region13: #{asdownsample_pallas.1} parent=1 // pred_fallthru
      _
    // Predicated region
    $region14: #{asdownsample_pallas.1} parent=1 // pred_check
      _
    $region15: #{asdownsample_pallas.1} parent=1 // pred_check_branch
      %22 = sbr.rel (0) target = $region17
    $region16: #{asdownsample_pallas.1} parent=1 // pred_region
      _
    $region17: #{asdownsample_pallas.1} parent=1 // pred_fallthru
      _
    // Predicated region
    $region18: #{asdownsample_pallas.1} parent=1 // pred_check
      _
    $region19: #{asdownsample_pallas.1} parent=1 // pred_check_branch
      %24 = sbr.rel (0) target = $region21
    $region20: #{asdownsample_pallas.1} parent=1 // pred_region
      _
    $region21: #{asdownsample_pallas.1} parent=1 // pred_fallthru
      _
    // Predicated region
    $region22: #{asdownsample_pallas.1} parent=1 // pred_check
      _
    $region23: #{asdownsample_pallas.1} parent=1 // pred_check_branch
      %26 = sbr.rel (0) target = $region25
    $region24: #{asdownsample_pallas.1} parent=1 // pred_region
      _
    $region25: #{asdownsample_pallas.1} parent=1 // pred_fallthru
      _
    // Predicated region
    $region26: #{asdownsample_pallas.1} parent=1 // pred_check
      _
    $region27: #{asdownsample_pallas.1} parent=1 // pred_check_branch
      %28 = sbr.rel (0) target = $region29
    $region28: #{asdownsample_pallas.1} parent=1 // pred_region
      _
    $region29: #{asdownsample_pallas.1} parent=1 // pred_fallthru
      _
    // Predicated region
    $region30: #{asdownsample_pallas.1} parent=1 // pred_check
      _
    $region31: #{asdownsample_pallas.1} parent=1 // pred_check_branch
      %30 = sbr.rel (0) target = $region33
    $region32: #{asdownsample_pallas.1} parent=1 // pred_region
      _
    $region33: #{asdownsample_pallas.1} parent=1 // pred_fallthru
      _
    // Predicated region
    $region34: #{asdownsample_pallas.1} parent=1 // pred_check
      _
    $region35: #{asdownsample_pallas.1} parent=1 // pred_check_branch
      %32 = sbr.rel (0) target = $region37
    $region36: #{asdownsample_pallas.1} parent=1 // pred_region
      _
    $region37: #{asdownsample_pallas.1} parent=1 // pred_fallthru
      _
    %v33 = vld [vmem:[%s0] sm:$0xff]
    %v34 = vld [vmem:[%s0 + $0x8] sm:$0x1]
    %v35 = vld [vmem:[%s0 + $0x10] sm:$0xff]
    %v36 = vld [vmem:[%s0 + $0x18] sm:$0x1]
    %v37 = vld [vmem:[%s0 + $0x20] sm:$0xff]
    %v38 = vld [vmem:[%s0 + $0x28] sm:$0x1]
    %v39 = vld [vmem:[%s0 + $0x30] sm:$0xff]
    %v40 = vld [vmem:[%s0 + $0x38] sm:$0x1]
    %v41 = vld [vmem:[%s0 + $0x40] sm:$0xff]
    %v42 = vld [vmem:[%s0 + $0x48] sm:$0x1]
    %v43 = vld [vmem:[%s0 + $0x50] sm:$0xff]
    %v44 = vld [vmem:[%s0 + $0x58] sm:$0x1]
    %v45 = vld [vmem:[%s0 + $0x60] sm:$0xff]
    %v46 = vld [vmem:[%s0 + $0x68] sm:$0x1]
    %v47 = vld [vmem:[%s0 + $0x70] sm:$0xff]
    %v48 = vld [vmem:[%s0 + $0x78] sm:$0x1]
    %v49 = vld [vmem:[%s0 + $0x80] sm:$0xff]
    %v50 = vld [vmem:[%s0 + $0x88] sm:$0x1]
    %v51 = vld [vmem:[%s0 + $0x90] sm:$0xff]
    %v52 = vld [vmem:[%s0 + $0x98] sm:$0x1]
    %v53 = vld [vmem:[%s0 + $0xa0] sm:$0xff]
    %v54 = vld [vmem:[%s0 + $0xa8] sm:$0x1]
    %v55 = vld [vmem:[%s0 + $0xb0] sm:$0xff]
    %v56 = vld [vmem:[%s0 + $0xb8] sm:$0x1]
    %v57 = vld [vmem:[%s0 + $0xc0] sm:$0xff]
    %v58 = vld [vmem:[%s0 + $0xc8] sm:$0x1]
    %v59 = vld [vmem:[%s0 + $0xd0] sm:$0xff]
    %v60 = vld [vmem:[%s0 + $0xd8] sm:$0x1]
    %v61 = vld [vmem:[%s0 + $0xe0] sm:$0xff]
    %v62 = vld [vmem:[%s0 + $0xe8] sm:$0x1]
    %v63 = vld [vmem:[%s0 + $0xf0] sm:$0xff]
    %v64 = vld [vmem:[%s0 + $0xf8] sm:$0x1]
    %v65 = vld [vmem:[%s0 + $0x100] sm:$0xff]
    %v66 = vld [vmem:[%s0 + $0x108] sm:$0x1]
    %v67 = vld [vmem:[%s0 + $0x110] sm:$0xff]
    %v68 = vld [vmem:[%s0 + $0x118] sm:$0x1]
    %vm101 = vcmask 1046528
    %v102 = vrot.slane %v33, 1
    %v103 = vrot.slane %v34, 1
    %v104 = vsel %vm101, %v102, %v103
    %v105 = vrot.slane %v35, 1
    %v106 = vrot.slane %v36, 1
    %v107 = vsel %vm101, %v105, %v106
    %v108 = vrot.slane %v37, 1
    %v109 = vrot.slane %v38, 1
    %v110 = vsel %vm101, %v108, %v109
    %v111 = vrot.slane %v39, 1
    %v112 = vrot.slane %v40, 1
    %v113 = vsel %vm101, %v111, %v112
    %v114 = vrot.slane %v41, 1
    %v115 = vrot.slane %v42, 1
    %v116 = vsel %vm101, %v114, %v115
    %v117 = vrot.slane %v43, 1
    %v118 = vrot.slane %v44, 1
    %v119 = vsel %vm101, %v117, %v118
    %v120 = vrot.slane %v45, 1
    %v121 = vrot.slane %v46, 1
    %v122 = vsel %vm101, %v120, %v121
    %v123 = vrot.slane %v47, 1
    %v124 = vrot.slane %v48, 1
    %v125 = vsel %vm101, %v123, %v124
    %v126 = vrot.slane %v51, 1
    %v127 = vrot.slane %v52, 1
    %v128 = vsel %vm101, %v126, %v127
    %v129 = vrot.slane %v53, 1
    %v130 = vrot.slane %v54, 1
    %v131 = vsel %vm101, %v129, %v130
    %v132 = vrot.slane %v55, 1
    %v133 = vrot.slane %v56, 1
    %v134 = vsel %vm101, %v132, %v133
    %v135 = vrot.slane %v57, 1
    %v136 = vrot.slane %v58, 1
    %v137 = vsel %vm101, %v135, %v136
    %v138 = vrot.slane %v59, 1
    %v139 = vrot.slane %v60, 1
    %v140 = vsel %vm101, %v138, %v139
    %v141 = vrot.slane %v61, 1
    %v142 = vrot.slane %v62, 1
    %v143 = vsel %vm101, %v141, %v142
    %v144 = vrot.slane %v63, 1
    %v145 = vrot.slane %v64, 1
    %v146 = vsel %vm101, %v144, %v145
    %v147 = vrot.slane %v65, 1
    %v148 = vrot.slane %v66, 1
    %v149 = vsel %vm101, %v147, %v148
    %150 = vrot.lane.b32.xlu0 %v104, 32
    %v151 = vpop.permute.xlu0 %150
    %152 = vrot.lane.b32.xlu0 %v107, 32
    %v153 = vpop.permute.xlu0 %152
    %154 = vrot.lane.b32.xlu0 %v110, 32
    %v155 = vpop.permute.xlu0 %154
    %156 = vrot.lane.b32.xlu0 %v113, 32
    %v157 = vpop.permute.xlu0 %156
    %158 = vrot.lane.b32.xlu0 %v116, 32
    %v159 = vpop.permute.xlu0 %158
    %160 = vrot.lane.b32.xlu0 %v119, 32
    %v161 = vpop.permute.xlu0 %160
    %162 = vrot.lane.b32.xlu0 %v122, 32
    %v163 = vpop.permute.xlu0 %162
    %164 = vrot.lane.b32.xlu0 %v125, 32
    %v165 = vpop.permute.xlu0 %164
    %166 = vrot.lane.b32.xlu0 %v128, 32
    %v167 = vpop.permute.xlu0 %166
    %168 = vrot.lane.b32.xlu0 %v131, 32
    %v169 = vpop.permute.xlu0 %168
    %170 = vrot.lane.b32.xlu0 %v134, 32
    %v171 = vpop.permute.xlu0 %170
    %172 = vrot.lane.b32.xlu0 %v137, 32
    %v173 = vpop.permute.xlu0 %172
    %174 = vrot.lane.b32.xlu0 %v140, 32
    %v175 = vpop.permute.xlu0 %174
    %176 = vrot.lane.b32.xlu0 %v143, 32
    %v177 = vpop.permute.xlu0 %176
    %178 = vrot.lane.b32.xlu0 %v146, 32
    %v179 = vpop.permute.xlu0 %178
    %180 = vrot.lane.b32.xlu0 %v149, 32
    %v181 = vpop.permute.xlu0 %180
    %200 = vrot.lane.b32.xlu0 %v35, 64
    %v201 = vpop.permute.xlu0 %200
    %202 = vrot.lane.b32.xlu0 %v37, 64
    %v203 = vpop.permute.xlu0 %202
    %204 = vrot.lane.b32.xlu0 %v39, 64
    %v205 = vpop.permute.xlu0 %204
    %206 = vrot.lane.b32.xlu0 %v41, 64
    %v207 = vpop.permute.xlu0 %206
    %208 = vrot.lane.b32.xlu0 %v43, 64
    %v209 = vpop.permute.xlu0 %208
    %210 = vrot.lane.b32.xlu0 %v45, 64
    %v211 = vpop.permute.xlu0 %210
    %212 = vrot.lane.b32.xlu0 %v47, 64
    %v213 = vpop.permute.xlu0 %212
    %214 = vrot.lane.b32.xlu0 %v49, 64
    %v215 = vpop.permute.xlu0 %214
    %216 = vrot.lane.b32.xlu0 %v53, 64
    %v217 = vpop.permute.xlu0 %216
    %218 = vrot.lane.b32.xlu0 %v55, 64
    %v219 = vpop.permute.xlu0 %218
    %220 = vrot.lane.b32.xlu0 %v57, 64
    %v221 = vpop.permute.xlu0 %220
    %222 = vrot.lane.b32.xlu0 %v59, 64
    %v223 = vpop.permute.xlu0 %222
    %224 = vrot.lane.b32.xlu0 %v61, 64
    %v225 = vpop.permute.xlu0 %224
    %226 = vrot.lane.b32.xlu0 %v63, 64
    %v227 = vpop.permute.xlu0 %226
    %228 = vrot.lane.b32.xlu0 %v65, 64
    %v229 = vpop.permute.xlu0 %228
    %230 = vrot.lane.b32.xlu0 %v67, 64
    %v231 = vpop.permute.xlu0 %230
    %v250 = vrot.slane %v49, 1
    %v251 = vrot.slane %v50, 1
    %v252 = vsel %vm101, %v250, %v251
    %v253 = vrot.slane %v67, 1
    %v254 = vrot.slane %v68, 1
    %v255 = vsel %vm101, %v253, %v254
    %256 = vrot.lane.b32.xlu0 %v107, 96
    %v257 = vpop.permute.xlu0 %256
    %258 = vrot.lane.b32.xlu0 %v110, 96
    %v259 = vpop.permute.xlu0 %258
    %260 = vrot.lane.b32.xlu0 %v113, 96
    %v261 = vpop.permute.xlu0 %260
    %262 = vrot.lane.b32.xlu0 %v116, 96
    %v263 = vpop.permute.xlu0 %262
    %264 = vrot.lane.b32.xlu0 %v119, 96
    %v265 = vpop.permute.xlu0 %264
    %266 = vrot.lane.b32.xlu0 %v122, 96
    %v267 = vpop.permute.xlu0 %266
    %268 = vrot.lane.b32.xlu0 %v125, 96
    %v269 = vpop.permute.xlu0 %268
    %270 = vrot.lane.b32.xlu0 %v252, 96
    %v271 = vpop.permute.xlu0 %270
    %272 = vrot.lane.b32.xlu0 %v131, 96
    %v273 = vpop.permute.xlu0 %272
    %274 = vrot.lane.b32.xlu0 %v134, 96
    %v275 = vpop.permute.xlu0 %274
    %276 = vrot.lane.b32.xlu0 %v137, 96
    %v277 = vpop.permute.xlu0 %276
    %278 = vrot.lane.b32.xlu0 %v140, 96
    %v279 = vpop.permute.xlu0 %278
    %280 = vrot.lane.b32.xlu0 %v143, 96
    %v281 = vpop.permute.xlu0 %280
    %282 = vrot.lane.b32.xlu0 %v146, 96
    %v283 = vpop.permute.xlu0 %282
    %284 = vrot.lane.b32.xlu0 %v149, 96
    %v285 = vpop.permute.xlu0 %284
    %286 = vrot.lane.b32.xlu0 %v255, 96
    %v287 = vpop.permute.xlu0 %286
    %vm304 = vcmask 261120
    %v305 = vsel %vm304, %v33, %v151
    %v306 = vsel %vm304, %v35, %v153
    %v307 = vsel %vm304, %v37, %v155
    %v308 = vsel %vm304, %v39, %v157
    %v309 = vsel %vm304, %v41, %v159
    %v310 = vsel %vm304, %v43, %v161
    %v311 = vsel %vm304, %v45, %v163
    %v312 = vsel %vm304, %v47, %v165
    %v313 = vsel %vm304, %v51, %v167
    %v314 = vsel %vm304, %v53, %v169
    %v315 = vsel %vm304, %v55, %v171
    %v316 = vsel %vm304, %v57, %v173
    %v317 = vsel %vm304, %v59, %v175
    %v318 = vsel %vm304, %v61, %v177
    %v319 = vsel %vm304, %v63, %v179
    %v320 = vsel %vm304, %v65, %v181
    %vm321 = vcmask 523264
    %v322 = vsel %vm321, %v305, %v201
    %v323 = vsel %vm321, %v306, %v203
    %v324 = vsel %vm321, %v307, %v205
    %v325 = vsel %vm321, %v308, %v207
    %v326 = vsel %vm321, %v309, %v209
    %v327 = vsel %vm321, %v310, %v211
    %v328 = vsel %vm321, %v311, %v213
    %v329 = vsel %vm321, %v312, %v215
    %v330 = vsel %vm321, %v313, %v217
    %v331 = vsel %vm321, %v314, %v219
    %v332 = vsel %vm321, %v315, %v221
    %v333 = vsel %vm321, %v316, %v223
    %v334 = vsel %vm321, %v317, %v225
    %v335 = vsel %vm321, %v318, %v227
    %v336 = vsel %vm321, %v319, %v229
    %v337 = vsel %vm321, %v320, %v231
    %vm338 = vcmask 785408
    %v339 = vsel %vm338, %v322, %v257
    %v340 = vsel %vm338, %v323, %v259
    %v341 = vsel %vm338, %v324, %v261
    %v342 = vsel %vm338, %v325, %v263
    %v343 = vsel %vm338, %v326, %v265
    %v344 = vsel %vm338, %v327, %v267
    %v345 = vsel %vm338, %v328, %v269
    %v346 = vsel %vm338, %v329, %v271
    %v347 = vsel %vm338, %v330, %v273
    %v348 = vsel %vm338, %v331, %v275
    %v349 = vsel %vm338, %v332, %v277
    %v350 = vsel %vm338, %v333, %v279
    %v351 = vsel %vm338, %v334, %v281
    %v352 = vsel %vm338, %v335, %v283
    %v353 = vsel %vm338, %v336, %v285
    %v354 = vsel %vm338, %v337, %v287
    %v355 = vld [vmem:[%s2] sm:$0xff]
    %v356 = vld [vmem:[%s2 + $0x8] sm:$0xff]
    %v357 = vld [vmem:[%s2 + $0x10] sm:$0xff]
    %v358 = vld [vmem:[%s2 + $0x18] sm:$0xff]
    %v359 = vld [vmem:[%s2 + $0x20] sm:$0xff]
    %v360 = vld [vmem:[%s2 + $0x28] sm:$0xff]
    %v361 = vld [vmem:[%s2 + $0x30] sm:$0xff]
    %v362 = vld [vmem:[%s2 + $0x38] sm:$0xff]
    %v363 = vld [vmem:[%s2 + $0x40] sm:$0xff]
    %v364 = vld [vmem:[%s2 + $0x48] sm:$0xff]
    %v365 = vld [vmem:[%s2 + $0x50] sm:$0xff]
    %v366 = vld [vmem:[%s2 + $0x58] sm:$0xff]
    %v367 = vld [vmem:[%s2 + $0x60] sm:$0xff]
    %v368 = vld [vmem:[%s2 + $0x68] sm:$0xff]
    %v369 = vld [vmem:[%s2 + $0x70] sm:$0xff]
    %v370 = vld [vmem:[%s2 + $0x78] sm:$0xff]
    %371 = vmatprep.subr.mxu0 0.0
    %372 = vmatpush1.msra.mxu0 %v355
    %373 = vmatprep.subr.mxu0 0.0
    %374 = vmatpush1.msra.mxu0 %v356
    %375 = vmatprep.subr.mxu0 0.0
    %376 = vmatpush1.msra.mxu0 %v357
    %377 = vmatprep.subr.mxu0 0.0
    %378 = vmatpush1.msra.mxu0 %v358
    %379 = vmatprep.subr.mxu0 0.0
    %380 = vmatpush1.msra.mxu0 %v359
    %381 = vmatprep.subr.mxu0 0.0
    %382 = vmatpush1.msra.mxu0 %v360
    %383 = vmatprep.subr.mxu0 0.0
    %384 = vmatpush1.msra.mxu0 %v361
    %385 = vmatprep.subr.mxu0 0.0
    %386 = vmatpush1.msra.mxu0 %v362
    %387 = vmatprep.subr.mxu0 0.0
    %388 = vmatpush1.msra.mxu0 %v363
    %389 = vmatprep.subr.mxu0 0.0
    %390 = vmatpush1.msra.mxu0 %v364
    %391 = vmatprep.subr.mxu0 0.0
    %392 = vmatpush1.msra.mxu0 %v365
    %393 = vmatprep.subr.mxu0 0.0
    %394 = vmatpush1.msra.mxu0 %v366
    %395 = vmatprep.subr.mxu0 0.0
    %396 = vmatpush1.msra.mxu0 %v367
    %397 = vmatprep.subr.mxu0 0.0
    %398 = vmatpush1.msra.mxu0 %v368
    %399 = vmatprep.subr.mxu0 0.0
    %400 = vmatpush1.msra.mxu0 %v369
    %401 = vmatprep.subr.mxu0 0.0
    %402 = vmatpush1.msra.mxu0 %v370
    %403 = vmatprep.subr.mxu0 0.0
    %404 = vmatpush1.msra.mxu0 0.0
    %405 = vmatprep.subr.mxu0 0.0
    %406 = vmatpush1.msra.mxu0 0.0
    %407 = vmatprep.subr.mxu0 0.0
    %408 = vmatpush1.msra.mxu0 0.0
    %409 = vmatprep.subr.mxu0 0.0
    %410 = vmatpush1.msra.mxu0 0.0
    %411 = vmatprep.subr.mxu0 0.0
    %412 = vmatpush1.msra.mxu0 0.0
    %413 = vmatprep.subr.mxu0 0.0
    %414 = vmatpush1.msra.mxu0 0.0
    %415 = vmatprep.subr.mxu0 0.0
    %416 = vmatpush1.msra.mxu0 0.0
    %417 = vmatprep.subr.mxu0 0.0
    %418 = vmatpush1.msra.mxu0 0.0
    %419 = vmatprep.subr.mxu0 0.0
    %420 = vmatpush1.msra.mxu0 0.0
    %421 = vmatprep.subr.mxu0 0.0
    %422 = vmatpush1.msra.mxu0 0.0
    %423 = vmatprep.subr.mxu0 0.0
    %424 = vmatpush1.msra.mxu0 0.0
    %425 = vmatprep.subr.mxu0 0.0
    %426 = vmatpush1.msra.mxu0 0.0
    %427 = vmatprep.subr.mxu0 0.0
    %428 = vmatpush1.msra.mxu0 0.0
    %429 = vmatprep.subr.mxu0 0.0
    %430 = vmatpush1.msra.mxu0 0.0
    %431 = vmatprep.subr.mxu0 0.0
    %432 = vmatpush1.msra.mxu0 0.0
    %433 = vmatprep.subr.mxu0 0.0
    %434 = vmatpush1.msra.mxu0 0.0
    %435 = vmatprep.mubr.f32.mxu0 0.0
    %436 = vmatmul.mubr.f32.gmra.mrb[0].mxu0 %v339
    %v437 = vpop.f32.mrb[0].mxu0
    %v438 = vadd.f32 0.0, %v437
    %v439 = vpop.f32.mrb[0].mxu0
    %440 = vmatprep.mubr.f32.mxu0 0.0
    %441 = vmatmul.mubr.f32.gmra.mrb[0].mxu0 %v340
    %v442 = vpop.f32.mrb[0].mxu0
    %v443 = vadd.f32 0.0, %v442
    %v444 = vpop.f32.mrb[0].mxu0
    %445 = vmatprep.mubr.f32.mxu0 0.0
    %446 = vmatmul.mubr.f32.gmra.mrb[0].mxu0 %v341
    %v447 = vpop.f32.mrb[0].mxu0
    %v448 = vadd.f32 0.0, %v447
    %v449 = vpop.f32.mrb[0].mxu0
    %450 = vmatprep.mubr.f32.mxu0 0.0
    %451 = vmatmul.mubr.f32.gmra.mrb[0].mxu0 %v342
    %v452 = vpop.f32.mrb[0].mxu0
    %v453 = vadd.f32 0.0, %v452
    %v454 = vpop.f32.mrb[0].mxu0
    %455 = vmatprep.mubr.f32.mxu0 0.0
    %456 = vmatmul.mubr.f32.gmra.mrb[0].mxu0 %v343
    %v457 = vpop.f32.mrb[0].mxu0
    %v458 = vadd.f32 0.0, %v457
    %v459 = vpop.f32.mrb[0].mxu0
    %460 = vmatprep.mubr.f32.mxu0 0.0
    %461 = vmatmul.mubr.f32.gmra.mrb[0].mxu0 %v344
    %v462 = vpop.f32.mrb[0].mxu0
    %v463 = vadd.f32 0.0, %v462
    %v464 = vpop.f32.mrb[0].mxu0
    %465 = vmatprep.mubr.f32.mxu0 0.0
    %466 = vmatmul.mubr.f32.gmra.mrb[0].mxu0 %v345
    %v467 = vpop.f32.mrb[0].mxu0
    %v468 = vadd.f32 0.0, %v467
    %v469 = vpop.f32.mrb[0].mxu0
    %470 = vmatprep.mubr.f32.mxu0 0.0
    %471 = vmatmul.mubr.f32.gmra.mrb[0].mxu0 %v346
    %v472 = vpop.f32.mrb[0].mxu0
    %v473 = vadd.f32 0.0, %v472
    %v474 = vpop.f32.mrb[0].mxu0
    %475 = vmatprep.mubr.f32.mxu0 0.0
    %476 = vmatmul.mubr.f32.gmra.mrb[0].mxu0 %v347
    %v477 = vpop.f32.mrb[0].mxu0
    %v478 = vadd.f32 0.0, %v477
    %v479 = vpop.f32.mrb[0].mxu0
    %480 = vmatprep.mubr.f32.mxu0 0.0
    %481 = vmatmul.mubr.f32.gmra.mrb[0].mxu0 %v348
    %v482 = vpop.f32.mrb[0].mxu0
    %v483 = vadd.f32 0.0, %v482
    %v484 = vpop.f32.mrb[0].mxu0
    %485 = vmatprep.mubr.f32.mxu0 0.0
    %486 = vmatmul.mubr.f32.gmra.mrb[0].mxu0 %v349
    %v487 = vpop.f32.mrb[0].mxu0
    %v488 = vadd.f32 0.0, %v487
    %v489 = vpop.f32.mrb[0].mxu0
    %490 = vmatprep.mubr.f32.mxu0 0.0
    %491 = vmatmul.mubr.f32.gmra.mrb[0].mxu0 %v350
    %v492 = vpop.f32.mrb[0].mxu0
    %v493 = vadd.f32 0.0, %v492
    %v494 = vpop.f32.mrb[0].mxu0
    %495 = vmatprep.mubr.f32.mxu0 0.0
    %496 = vmatmul.mubr.f32.gmra.mrb[0].mxu0 %v351
    %v497 = vpop.f32.mrb[0].mxu0
    %v498 = vadd.f32 0.0, %v497
    %v499 = vpop.f32.mrb[0].mxu0
    %500 = vmatprep.mubr.f32.mxu0 0.0
    %501 = vmatmul.mubr.f32.gmra.mrb[0].mxu0 %v352
    %v502 = vpop.f32.mrb[0].mxu0
    %v503 = vadd.f32 0.0, %v502
    %v504 = vpop.f32.mrb[0].mxu0
    %505 = vmatprep.mubr.f32.mxu0 0.0
    %506 = vmatmul.mubr.f32.gmra.mrb[0].mxu0 %v353
    %v507 = vpop.f32.mrb[0].mxu0
    %v508 = vadd.f32 0.0, %v507
    %v509 = vpop.f32.mrb[0].mxu0
    %510 = vmatprep.mubr.f32.mxu0 0.0
    %511 = vmatmul.mubr.f32.gmra.mrb[0].mxu0 %v354
    %v512 = vpop.f32.mrb[0].mxu0
    %v513 = vadd.f32 0.0, %v512
    %v514 = vpop.f32.mrb[0].mxu0
    %515 = vdwg.mxu0
    %v516 = vld [vmem:[%s1] sm:$0xff]
    %v517 = vld [vmem:[%s1 + $0x8] sm:$0x3]
    %v518 = vld [vmem:[%s1 + $0x10] sm:$0xff]
    %v519 = vld [vmem:[%s1 + $0x18] sm:$0x3]
    %v520 = vld [vmem:[%s1 + $0x20] sm:$0xff]
    %v521 = vld [vmem:[%s1 + $0x28] sm:$0x3]
    %v522 = vld [vmem:[%s1 + $0x30] sm:$0xff]
    %v523 = vld [vmem:[%s1 + $0x38] sm:$0x3]
    %v524 = vld [vmem:[%s1 + $0x40] sm:$0xff]
    %v525 = vld [vmem:[%s1 + $0x48] sm:$0x3]
    %v526 = vld [vmem:[%s1 + $0x50] sm:$0xff]
    %v527 = vld [vmem:[%s1 + $0x58] sm:$0x3]
    %v528 = vld [vmem:[%s1 + $0x60] sm:$0xff]
    %v529 = vld [vmem:[%s1 + $0x68] sm:$0x3]
    %v530 = vld [vmem:[%s1 + $0x70] sm:$0xff]
    %v531 = vld [vmem:[%s1 + $0x78] sm:$0x3]
    %v532 = vld [vmem:[%s1 + $0x80] sm:$0xff]
    %v533 = vld [vmem:[%s1 + $0x88] sm:$0x3]
    %v534 = vld [vmem:[%s1 + $0x90] sm:$0xff]
    %v535 = vld [vmem:[%s1 + $0x98] sm:$0x3]
    %v536 = vld [vmem:[%s1 + $0xa0] sm:$0xff]
    %v537 = vld [vmem:[%s1 + $0xa8] sm:$0x3]
    %v538 = vld [vmem:[%s1 + $0xb0] sm:$0xff]
    %v539 = vld [vmem:[%s1 + $0xb8] sm:$0x3]
    %v540 = vld [vmem:[%s1 + $0xc0] sm:$0xff]
    %v541 = vld [vmem:[%s1 + $0xc8] sm:$0x3]
    %v542 = vld [vmem:[%s1 + $0xd0] sm:$0xff]
    %v543 = vld [vmem:[%s1 + $0xd8] sm:$0x3]
    %v544 = vld [vmem:[%s1 + $0xe0] sm:$0xff]
    %v545 = vld [vmem:[%s1 + $0xe8] sm:$0x3]
    %v546 = vld [vmem:[%s1 + $0xf0] sm:$0xff]
    %v547 = vld [vmem:[%s1 + $0xf8] sm:$0x3]
    %v548 = vld [vmem:[%s1 + $0x100] sm:$0xff]
    %v549 = vld [vmem:[%s1 + $0x108] sm:$0x3]
    %v550 = vld [vmem:[%s1 + $0x110] sm:$0xff]
    %v551 = vld [vmem:[%s1 + $0x118] sm:$0x3]
    %v552 = vld [vmem:[%s1 + $0x120] sm:$0xff]
    %v553 = vld [vmem:[%s1 + $0x128] sm:$0x3]
    %v554 = vld [vmem:[%s1 + $0x130] sm:$0xff]
    %v555 = vld [vmem:[%s1 + $0x138] sm:$0x3]
    %v588 = vrot.slane %v516, 1
    %v589 = vrot.slane %v517, 1
    %v590 = vsel %vm101, %v588, %v589
    %v591 = vrot.slane %v518, 1
    %v592 = vrot.slane %v519, 1
    %v593 = vsel %vm101, %v591, %v592
    %v594 = vrot.slane %v520, 1
    %v595 = vrot.slane %v521, 1
    %v596 = vsel %vm101, %v594, %v595
    %v597 = vrot.slane %v522, 1
    %v598 = vrot.slane %v523, 1
    %v599 = vsel %vm101, %v597, %v598
    %v600 = vrot.slane %v524, 1
    %v601 = vrot.slane %v525, 1
    %v602 = vsel %vm101, %v600, %v601
    %v603 = vrot.slane %v526, 1
    %v604 = vrot.slane %v527, 1
    %v605 = vsel %vm101, %v603, %v604
    %v606 = vrot.slane %v528, 1
    %v607 = vrot.slane %v529, 1
    %v608 = vsel %vm101, %v606, %v607
    %v609 = vrot.slane %v530, 1
    %v610 = vrot.slane %v531, 1
    %v611 = vsel %vm101, %v609, %v610
    %v612 = vrot.slane %v536, 1
    %v613 = vrot.slane %v537, 1
    %v614 = vsel %vm101, %v612, %v613
    %v615 = vrot.slane %v538, 1
    %v616 = vrot.slane %v539, 1
    %v617 = vsel %vm101, %v615, %v616
    %v618 = vrot.slane %v540, 1
    %v619 = vrot.slane %v541, 1
    %v620 = vsel %vm101, %v618, %v619
    %v621 = vrot.slane %v542, 1
    %v622 = vrot.slane %v543, 1
    %v623 = vsel %vm101, %v621, %v622
    %v624 = vrot.slane %v544, 1
    %v625 = vrot.slane %v545, 1
    %v626 = vsel %vm101, %v624, %v625
    %v627 = vrot.slane %v546, 1
    %v628 = vrot.slane %v547, 1
    %v629 = vsel %vm101, %v627, %v628
    %v630 = vrot.slane %v548, 1
    %v631 = vrot.slane %v549, 1
    %v632 = vsel %vm101, %v630, %v631
    %v633 = vrot.slane %v550, 1
    %v634 = vrot.slane %v551, 1
    %v635 = vsel %vm101, %v633, %v634
    %636 = vrot.lane.b32.xlu0 %v590, 32
    %v637 = vpop.permute.xlu0 %636
    %638 = vrot.lane.b32.xlu0 %v593, 32
    %v639 = vpop.permute.xlu0 %638
    %640 = vrot.lane.b32.xlu0 %v596, 32
    %v641 = vpop.permute.xlu0 %640
    %642 = vrot.lane.b32.xlu0 %v599, 32
    %v643 = vpop.permute.xlu0 %642
    %644 = vrot.lane.b32.xlu0 %v602, 32
    %v645 = vpop.permute.xlu0 %644
    %646 = vrot.lane.b32.xlu0 %v605, 32
    %v647 = vpop.permute.xlu0 %646
    %648 = vrot.lane.b32.xlu0 %v608, 32
    %v649 = vpop.permute.xlu0 %648
    %650 = vrot.lane.b32.xlu0 %v611, 32
    %v651 = vpop.permute.xlu0 %650
    %652 = vrot.lane.b32.xlu0 %v614, 32
    %v653 = vpop.permute.xlu0 %652
    %654 = vrot.lane.b32.xlu0 %v617, 32
    %v655 = vpop.permute.xlu0 %654
    %656 = vrot.lane.b32.xlu0 %v620, 32
    %v657 = vpop.permute.xlu0 %656
    %658 = vrot.lane.b32.xlu0 %v623, 32
    %v659 = vpop.permute.xlu0 %658
    %660 = vrot.lane.b32.xlu0 %v626, 32
    %v661 = vpop.permute.xlu0 %660
    %662 = vrot.lane.b32.xlu0 %v629, 32
    %v663 = vpop.permute.xlu0 %662
    %664 = vrot.lane.b32.xlu0 %v632, 32
    %v665 = vpop.permute.xlu0 %664
    %666 = vrot.lane.b32.xlu0 %v635, 32
    %v667 = vpop.permute.xlu0 %666
    %vm684 = vcmask 1045504
    %v685 = vrot.slane %v516, 2
    %v686 = vrot.slane %v517, 2
    %v687 = vsel %vm684, %v685, %v686
    %v688 = vrot.slane %v518, 2
    %v689 = vrot.slane %v519, 2
    %v690 = vsel %vm684, %v688, %v689
    %v691 = vrot.slane %v520, 2
    %v692 = vrot.slane %v521, 2
    %v693 = vsel %vm684, %v691, %v692
    %v694 = vrot.slane %v522, 2
    %v695 = vrot.slane %v523, 2
    %v696 = vsel %vm684, %v694, %v695
    %v697 = vrot.slane %v524, 2
    %v698 = vrot.slane %v525, 2
    %v699 = vsel %vm684, %v697, %v698
    %v700 = vrot.slane %v526, 2
    %v701 = vrot.slane %v527, 2
    %v702 = vsel %vm684, %v700, %v701
    %v703 = vrot.slane %v528, 2
    %v704 = vrot.slane %v529, 2
    %v705 = vsel %vm684, %v703, %v704
    %v706 = vrot.slane %v530, 2
    %v707 = vrot.slane %v531, 2
    %v708 = vsel %vm684, %v706, %v707
    %v709 = vrot.slane %v536, 2
    %v710 = vrot.slane %v537, 2
    %v711 = vsel %vm684, %v709, %v710
    %v712 = vrot.slane %v538, 2
    %v713 = vrot.slane %v539, 2
    %v714 = vsel %vm684, %v712, %v713
    %v715 = vrot.slane %v540, 2
    %v716 = vrot.slane %v541, 2
    %v717 = vsel %vm684, %v715, %v716
    %v718 = vrot.slane %v542, 2
    %v719 = vrot.slane %v543, 2
    %v720 = vsel %vm684, %v718, %v719
    %v721 = vrot.slane %v544, 2
    %v722 = vrot.slane %v545, 2
    %v723 = vsel %vm684, %v721, %v722
    %v724 = vrot.slane %v546, 2
    %v725 = vrot.slane %v547, 2
    %v726 = vsel %vm684, %v724, %v725
    %v727 = vrot.slane %v548, 2
    %v728 = vrot.slane %v549, 2
    %v729 = vsel %vm684, %v727, %v728
    %v730 = vrot.slane %v550, 2
    %v731 = vrot.slane %v551, 2
    %v732 = vsel %vm684, %v730, %v731
    %733 = vrot.lane.b32.xlu0 %v687, 64
    %v734 = vpop.permute.xlu0 %733
    %735 = vrot.lane.b32.xlu0 %v690, 64
    %v736 = vpop.permute.xlu0 %735
    %737 = vrot.lane.b32.xlu0 %v693, 64
    %v738 = vpop.permute.xlu0 %737
    %739 = vrot.lane.b32.xlu0 %v696, 64
    %v740 = vpop.permute.xlu0 %739
    %741 = vrot.lane.b32.xlu0 %v699, 64
    %v742 = vpop.permute.xlu0 %741
    %743 = vrot.lane.b32.xlu0 %v702, 64
    %v744 = vpop.permute.xlu0 %743
    %745 = vrot.lane.b32.xlu0 %v705, 64
    %v746 = vpop.permute.xlu0 %745
    %747 = vrot.lane.b32.xlu0 %v708, 64
    %v748 = vpop.permute.xlu0 %747
    %749 = vrot.lane.b32.xlu0 %v711, 64
    %v750 = vpop.permute.xlu0 %749
    %751 = vrot.lane.b32.xlu0 %v714, 64
    %v752 = vpop.permute.xlu0 %751
    %753 = vrot.lane.b32.xlu0 %v717, 64
    %v754 = vpop.permute.xlu0 %753
    %755 = vrot.lane.b32.xlu0 %v720, 64
    %v756 = vpop.permute.xlu0 %755
    %757 = vrot.lane.b32.xlu0 %v723, 64
    %v758 = vpop.permute.xlu0 %757
    %759 = vrot.lane.b32.xlu0 %v726, 64
    %v760 = vpop.permute.xlu0 %759
    %761 = vrot.lane.b32.xlu0 %v729, 64
    %v762 = vpop.permute.xlu0 %761
    %763 = vrot.lane.b32.xlu0 %v732, 64
    %v764 = vpop.permute.xlu0 %763
    %783 = vrot.lane.b32.xlu0 %v518, 96
    %v784 = vpop.permute.xlu0 %783
    %785 = vrot.lane.b32.xlu0 %v520, 96
    %v786 = vpop.permute.xlu0 %785
    %787 = vrot.lane.b32.xlu0 %v522, 96
    %v788 = vpop.permute.xlu0 %787
    %789 = vrot.lane.b32.xlu0 %v524, 96
    %v790 = vpop.permute.xlu0 %789
    %791 = vrot.lane.b32.xlu0 %v526, 96
    %v792 = vpop.permute.xlu0 %791
    %793 = vrot.lane.b32.xlu0 %v528, 96
    %v794 = vpop.permute.xlu0 %793
    %795 = vrot.lane.b32.xlu0 %v530, 96
    %v796 = vpop.permute.xlu0 %795
    %797 = vrot.lane.b32.xlu0 %v532, 96
    %v798 = vpop.permute.xlu0 %797
    %799 = vrot.lane.b32.xlu0 %v538, 96
    %v800 = vpop.permute.xlu0 %799
    %801 = vrot.lane.b32.xlu0 %v540, 96
    %v802 = vpop.permute.xlu0 %801
    %803 = vrot.lane.b32.xlu0 %v542, 96
    %v804 = vpop.permute.xlu0 %803
    %805 = vrot.lane.b32.xlu0 %v544, 96
    %v806 = vpop.permute.xlu0 %805
    %807 = vrot.lane.b32.xlu0 %v546, 96
    %v808 = vpop.permute.xlu0 %807
    %809 = vrot.lane.b32.xlu0 %v548, 96
    %v810 = vpop.permute.xlu0 %809
    %811 = vrot.lane.b32.xlu0 %v550, 96
    %v812 = vpop.permute.xlu0 %811
    %813 = vrot.lane.b32.xlu0 %v552, 96
    %v814 = vpop.permute.xlu0 %813
    %v833 = vrot.slane %v532, 1
    %v834 = vrot.slane %v533, 1
    %v835 = vsel %vm101, %v833, %v834
    %v836 = vrot.slane %v552, 1
    %v837 = vrot.slane %v553, 1
    %v838 = vsel %vm101, %v836, %v837
    %v855 = vrot.slane %v532, 2
    %v856 = vrot.slane %v533, 2
    %v857 = vsel %vm684, %v855, %v856
    %v858 = vrot.slane %v552, 2
    %v859 = vrot.slane %v553, 2
    %v860 = vsel %vm684, %v858, %v859
    %861 = vrot.lane.b32.xlu0 %v690, 32
    %v862 = vpop.permute.xlu0 %861
    %863 = vrot.lane.b32.xlu0 %v693, 32
    %v864 = vpop.permute.xlu0 %863
    %865 = vrot.lane.b32.xlu0 %v696, 32
    %v866 = vpop.permute.xlu0 %865
    %867 = vrot.lane.b32.xlu0 %v699, 32
    %v868 = vpop.permute.xlu0 %867
    %869 = vrot.lane.b32.xlu0 %v702, 32
    %v870 = vpop.permute.xlu0 %869
    %871 = vrot.lane.b32.xlu0 %v705, 32
    %v872 = vpop.permute.xlu0 %871
    %873 = vrot.lane.b32.xlu0 %v708, 32
    %v874 = vpop.permute.xlu0 %873
    %875 = vrot.lane.b32.xlu0 %v857, 32
    %v876 = vpop.permute.xlu0 %875
    %877 = vrot.lane.b32.xlu0 %v714, 32
    %v878 = vpop.permute.xlu0 %877
    %879 = vrot.lane.b32.xlu0 %v717, 32
    %v880 = vpop.permute.xlu0 %879
    %881 = vrot.lane.b32.xlu0 %v720, 32
    %v882 = vpop.permute.xlu0 %881
    %883 = vrot.lane.b32.xlu0 %v723, 32
    %v884 = vpop.permute.xlu0 %883
    %885 = vrot.lane.b32.xlu0 %v726, 32
    %v886 = vpop.permute.xlu0 %885
    %887 = vrot.lane.b32.xlu0 %v729, 32
    %v888 = vpop.permute.xlu0 %887
    %889 = vrot.lane.b32.xlu0 %v732, 32
    %v890 = vpop.permute.xlu0 %889
    %891 = vrot.lane.b32.xlu0 %v860, 32
    %v892 = vpop.permute.xlu0 %891
    %911 = vrot.lane.b32.xlu0 %v520, 64
    %v912 = vpop.permute.xlu0 %911
    %913 = vrot.lane.b32.xlu0 %v522, 64
    %v914 = vpop.permute.xlu0 %913
    %915 = vrot.lane.b32.xlu0 %v524, 64
    %v916 = vpop.permute.xlu0 %915
    %917 = vrot.lane.b32.xlu0 %v526, 64
    %v918 = vpop.permute.xlu0 %917
    %919 = vrot.lane.b32.xlu0 %v528, 64
    %v920 = vpop.permute.xlu0 %919
    %921 = vrot.lane.b32.xlu0 %v530, 64
    %v922 = vpop.permute.xlu0 %921
    %923 = vrot.lane.b32.xlu0 %v532, 64
    %v924 = vpop.permute.xlu0 %923
    %925 = vrot.lane.b32.xlu0 %v534, 64
    %v926 = vpop.permute.xlu0 %925
    %927 = vrot.lane.b32.xlu0 %v540, 64
    %v928 = vpop.permute.xlu0 %927
    %929 = vrot.lane.b32.xlu0 %v542, 64
    %v930 = vpop.permute.xlu0 %929
    %931 = vrot.lane.b32.xlu0 %v544, 64
    %v932 = vpop.permute.xlu0 %931
    %933 = vrot.lane.b32.xlu0 %v546, 64
    %v934 = vpop.permute.xlu0 %933
    %935 = vrot.lane.b32.xlu0 %v548, 64
    %v936 = vpop.permute.xlu0 %935
    %937 = vrot.lane.b32.xlu0 %v550, 64
    %v938 = vpop.permute.xlu0 %937
    %939 = vrot.lane.b32.xlu0 %v552, 64
    %v940 = vpop.permute.xlu0 %939
    %941 = vrot.lane.b32.xlu0 %v554, 64
    %v942 = vpop.permute.xlu0 %941
    %v961 = vrot.slane %v534, 1
    %v962 = vrot.slane %v535, 1
    %v963 = vsel %vm101, %v961, %v962
    %v964 = vrot.slane %v554, 1
    %v965 = vrot.slane %v555, 1
    %v966 = vsel %vm101, %v964, %v965
    %967 = vrot.lane.b32.xlu0 %v596, 96
    %v968 = vpop.permute.xlu0 %967
    %969 = vrot.lane.b32.xlu0 %v599, 96
    %v970 = vpop.permute.xlu0 %969
    %971 = vrot.lane.b32.xlu0 %v602, 96
    %v972 = vpop.permute.xlu0 %971
    %973 = vrot.lane.b32.xlu0 %v605, 96
    %v974 = vpop.permute.xlu0 %973
    %975 = vrot.lane.b32.xlu0 %v608, 96
    %v976 = vpop.permute.xlu0 %975
    %977 = vrot.lane.b32.xlu0 %v611, 96
    %v978 = vpop.permute.xlu0 %977
    %979 = vrot.lane.b32.xlu0 %v835, 96
    %v980 = vpop.permute.xlu0 %979
    %981 = vrot.lane.b32.xlu0 %v963, 96
    %v982 = vpop.permute.xlu0 %981
    %983 = vrot.lane.b32.xlu0 %v620, 96
    %v984 = vpop.permute.xlu0 %983
    %985 = vrot.lane.b32.xlu0 %v623, 96
    %v986 = vpop.permute.xlu0 %985
    %987 = vrot.lane.b32.xlu0 %v626, 96
    %v988 = vpop.permute.xlu0 %987
    %989 = vrot.lane.b32.xlu0 %v629, 96
    %v990 = vpop.permute.xlu0 %989
    %991 = vrot.lane.b32.xlu0 %v632, 96
    %v992 = vpop.permute.xlu0 %991
    %993 = vrot.lane.b32.xlu0 %v635, 96
    %v994 = vpop.permute.xlu0 %993
    %995 = vrot.lane.b32.xlu0 %v838, 96
    %v996 = vpop.permute.xlu0 %995
    %997 = vrot.lane.b32.xlu0 %v966, 96
    %v998 = vpop.permute.xlu0 %997
    %v1015 = vrot.slane %v534, 2
    %v1016 = vrot.slane %v535, 2
    %v1017 = vsel %vm684, %v1015, %v1016
    %v1018 = vrot.slane %v554, 2
    %v1019 = vrot.slane %v555, 2
    %v1020 = vsel %vm684, %v1018, %v1019
    %v1021 = vsel %vm304, %v516, %v637
    %v1022 = vsel %vm304, %v518, %v639
    %v1023 = vsel %vm304, %v520, %v641
    %v1024 = vsel %vm304, %v522, %v643
    %v1025 = vsel %vm304, %v524, %v645
    %v1026 = vsel %vm304, %v526, %v647
    %v1027 = vsel %vm304, %v528, %v649
    %v1028 = vsel %vm304, %v530, %v651
    %v1029 = vsel %vm304, %v536, %v653
    %v1030 = vsel %vm304, %v538, %v655
    %v1031 = vsel %vm304, %v540, %v657
    %v1032 = vsel %vm304, %v542, %v659
    %v1033 = vsel %vm304, %v544, %v661
    %v1034 = vsel %vm304, %v546, %v663
    %v1035 = vsel %vm304, %v548, %v665
    %v1036 = vsel %vm304, %v550, %v667
    %v1037 = vsel %vm321, %v1021, %v734
    %v1038 = vsel %vm321, %v1022, %v736
    %v1039 = vsel %vm321, %v1023, %v738
    %v1040 = vsel %vm321, %v1024, %v740
    %v1041 = vsel %vm321, %v1025, %v742
    %v1042 = vsel %vm321, %v1026, %v744
    %v1043 = vsel %vm321, %v1027, %v746
    %v1044 = vsel %vm321, %v1028, %v748
    %v1045 = vsel %vm321, %v1029, %v750
    %v1046 = vsel %vm321, %v1030, %v752
    %v1047 = vsel %vm321, %v1031, %v754
    %v1048 = vsel %vm321, %v1032, %v756
    %v1049 = vsel %vm321, %v1033, %v758
    %v1050 = vsel %vm321, %v1034, %v760
    %v1051 = vsel %vm321, %v1035, %v762
    %v1052 = vsel %vm321, %v1036, %v764
    %v1053 = vsel %vm338, %v1037, %v784
    %v1054 = vsel %vm338, %v1038, %v786
    %v1055 = vsel %vm338, %v1039, %v788
    %v1056 = vsel %vm338, %v1040, %v790
    %v1057 = vsel %vm338, %v1041, %v792
    %v1058 = vsel %vm338, %v1042, %v794
    %v1059 = vsel %vm338, %v1043, %v796
    %v1060 = vsel %vm338, %v1044, %v798
    %v1061 = vsel %vm338, %v1045, %v800
    %v1062 = vsel %vm338, %v1046, %v802
    %v1063 = vsel %vm338, %v1047, %v804
    %v1064 = vsel %vm338, %v1048, %v806
    %v1065 = vsel %vm338, %v1049, %v808
    %v1066 = vsel %vm338, %v1050, %v810
    %v1067 = vsel %vm338, %v1051, %v812
    %v1068 = vsel %vm338, %v1052, %v814
    %v1069 = vsel %vm304, %v593, %v862
    %v1070 = vsel %vm304, %v596, %v864
    %v1071 = vsel %vm304, %v599, %v866
    %v1072 = vsel %vm304, %v602, %v868
    %v1073 = vsel %vm304, %v605, %v870
    %v1074 = vsel %vm304, %v608, %v872
    %v1075 = vsel %vm304, %v611, %v874
    %v1076 = vsel %vm304, %v835, %v876
    %v1077 = vsel %vm304, %v617, %v878
    %v1078 = vsel %vm304, %v620, %v880
    %v1079 = vsel %vm304, %v623, %v882
    %v1080 = vsel %vm304, %v626, %v884
    %v1081 = vsel %vm304, %v629, %v886
    %v1082 = vsel %vm304, %v632, %v888
    %v1083 = vsel %vm304, %v635, %v890
    %v1084 = vsel %vm304, %v838, %v892
    %v1085 = vsel %vm321, %v1069, %v912
    %v1086 = vsel %vm321, %v1070, %v914
    %v1087 = vsel %vm321, %v1071, %v916
    %v1088 = vsel %vm321, %v1072, %v918
    %v1089 = vsel %vm321, %v1073, %v920
    %v1090 = vsel %vm321, %v1074, %v922
    %v1091 = vsel %vm321, %v1075, %v924
    %v1092 = vsel %vm321, %v1076, %v926
    %v1093 = vsel %vm321, %v1077, %v928
    %v1094 = vsel %vm321, %v1078, %v930
    %v1095 = vsel %vm321, %v1079, %v932
    %v1096 = vsel %vm321, %v1080, %v934
    %v1097 = vsel %vm321, %v1081, %v936
    %v1098 = vsel %vm321, %v1082, %v938
    %v1099 = vsel %vm321, %v1083, %v940
    %v1100 = vsel %vm321, %v1084, %v942
    %v1101 = vsel %vm338, %v1085, %v968
    %v1102 = vsel %vm338, %v1086, %v970
    %v1103 = vsel %vm338, %v1087, %v972
    %v1104 = vsel %vm338, %v1088, %v974
    %v1105 = vsel %vm338, %v1089, %v976
    %v1106 = vsel %vm338, %v1090, %v978
    %v1107 = vsel %vm338, %v1091, %v980
    %v1108 = vsel %vm338, %v1092, %v982
    %v1109 = vsel %vm338, %v1093, %v984
    %v1110 = vsel %vm338, %v1094, %v986
    %v1111 = vsel %vm338, %v1095, %v988
    %v1112 = vsel %vm338, %v1096, %v990
    %v1113 = vsel %vm338, %v1097, %v992
    %v1114 = vsel %vm338, %v1098, %v994
    %v1115 = vsel %vm338, %v1099, %v996
    %v1116 = vsel %vm338, %v1100, %v998
    %v1117 = vld [vmem:[%s3] sm:$0xff]
    %v1118 = vld [vmem:[%s3 + $0x8] sm:$0xff]
    %v1119 = vld [vmem:[%s3 + $0x10] sm:$0xff]
    %v1120 = vld [vmem:[%s3 + $0x18] sm:$0xff]
    %v1121 = vld [vmem:[%s3 + $0x20] sm:$0xff]
    %v1122 = vld [vmem:[%s3 + $0x28] sm:$0xff]
    %v1123 = vld [vmem:[%s3 + $0x30] sm:$0xff]
    %v1124 = vld [vmem:[%s3 + $0x38] sm:$0xff]
    %v1125 = vld [vmem:[%s3 + $0x40] sm:$0xff]
    %v1126 = vld [vmem:[%s3 + $0x48] sm:$0xff]
    %v1127 = vld [vmem:[%s3 + $0x50] sm:$0xff]
    %v1128 = vld [vmem:[%s3 + $0x58] sm:$0xff]
    %v1129 = vld [vmem:[%s3 + $0x60] sm:$0xff]
    %v1130 = vld [vmem:[%s3 + $0x68] sm:$0xff]
    %v1131 = vld [vmem:[%s3 + $0x70] sm:$0xff]
    %v1132 = vld [vmem:[%s3 + $0x78] sm:$0xff]
    %v1133 = vld [vmem:[%s3 + $0x80] sm:$0xff]
    %v1134 = vld [vmem:[%s3 + $0x88] sm:$0xff]
    %v1135 = vld [vmem:[%s3 + $0x90] sm:$0xff]
    %v1136 = vld [vmem:[%s3 + $0x98] sm:$0xff]
    %v1137 = vld [vmem:[%s3 + $0xa0] sm:$0xff]
    %v1138 = vld [vmem:[%s3 + $0xa8] sm:$0xff]
    %v1139 = vld [vmem:[%s3 + $0xb0] sm:$0xff]
    %v1140 = vld [vmem:[%s3 + $0xb8] sm:$0xff]
    %v1141 = vld [vmem:[%s3 + $0xc0] sm:$0xff]
    %v1142 = vld [vmem:[%s3 + $0xc8] sm:$0xff]
    %v1143 = vld [vmem:[%s3 + $0xd0] sm:$0xff]
    %v1144 = vld [vmem:[%s3 + $0xd8] sm:$0xff]
    %v1145 = vld [vmem:[%s3 + $0xe0] sm:$0xff]
    %v1146 = vld [vmem:[%s3 + $0xe8] sm:$0xff]
    %v1147 = vld [vmem:[%s3 + $0xf0] sm:$0xff]
    %v1148 = vld [vmem:[%s3 + $0xf8] sm:$0xff]
    %v1149 = vld [vmem:[%s3 + $0x100] sm:$0xff]
    %v1150 = vld [vmem:[%s3 + $0x108] sm:$0xff]
    %v1151 = vld [vmem:[%s3 + $0x110] sm:$0xff]
    %v1152 = vld [vmem:[%s3 + $0x118] sm:$0xff]
    %v1153 = vsel %vm304, %v693, 0
    %v1155 = vsel %vm304, %v696, 0
    %v1157 = vsel %vm304, %v699, 0
    %v1159 = vsel %vm304, %v702, 0
    %v1161 = vsel %vm304, %v705, 0
    %v1163 = vsel %vm304, %v708, 0
    %v1165 = vsel %vm304, %v857, 0
    %v1167 = vsel %vm304, %v1017, 0
    %v1169 = vsel %vm304, %v717, 0
    %v1171 = vsel %vm304, %v720, 0
    %v1173 = vsel %vm304, %v723, 0
    %v1175 = vsel %vm304, %v726, 0
    %v1177 = vsel %vm304, %v729, 0
    %v1179 = vsel %vm304, %v732, 0
    %v1181 = vsel %vm304, %v860, 0
    %v1183 = vsel %vm304, %v1020, 0
    %1185 = vmatprep.subr.mxu0 0.0
    %1186 = vmatpush1.msra.mxu0 %v1117
    %1187 = vmatprep.subr.mxu0 0.0
    %1188 = vmatpush1.msra.mxu0 %v1118
    %1189 = vmatprep.subr.mxu0 0.0
    %1190 = vmatpush1.msra.mxu0 %v1119
    %1191 = vmatprep.subr.mxu0 0.0
    %1192 = vmatpush1.msra.mxu0 %v1120
    %1193 = vmatprep.subr.mxu0 0.0
    %1194 = vmatpush1.msra.mxu0 %v1121
    %1195 = vmatprep.subr.mxu0 0.0
    %1196 = vmatpush1.msra.mxu0 %v1122
    %1197 = vmatprep.subr.mxu0 0.0
    %1198 = vmatpush1.msra.mxu0 %v1123
    %1199 = vmatprep.subr.mxu0 0.0
    %1200 = vmatpush1.msra.mxu0 %v1124
    %1201 = vmatprep.subr.mxu0 0.0
    %1202 = vmatpush1.msra.mxu0 %v1125
    %1203 = vmatprep.subr.mxu0 0.0
    %1204 = vmatpush1.msra.mxu0 %v1126
    %1205 = vmatprep.subr.mxu0 0.0
    %1206 = vmatpush1.msra.mxu0 %v1127
    %1207 = vmatprep.subr.mxu0 0.0
    %1208 = vmatpush1.msra.mxu0 %v1128
    %1209 = vmatprep.subr.mxu0 0.0
    %1210 = vmatpush1.msra.mxu0 %v1129
    %1211 = vmatprep.subr.mxu0 0.0
    %1212 = vmatpush1.msra.mxu0 %v1130
    %1213 = vmatprep.subr.mxu0 0.0
    %1214 = vmatpush1.msra.mxu0 %v1131
    %1215 = vmatprep.subr.mxu0 0.0
    %1216 = vmatpush1.msra.mxu0 %v1132
    %1217 = vmatprep.subr.mxu0 0.0
    %1218 = vmatpush1.msra.mxu0 %v1133
    %1219 = vmatprep.subr.mxu0 0.0
    %1220 = vmatpush1.msra.mxu0 %v1134
    %1221 = vmatprep.subr.mxu0 0.0
    %1222 = vmatpush1.msra.mxu0 %v1135
    %1223 = vmatprep.subr.mxu0 0.0
    %1224 = vmatpush1.msra.mxu0 %v1136
    %1225 = vmatprep.subr.mxu0 0.0
    %1226 = vmatpush1.msra.mxu0 %v1137
    %1227 = vmatprep.subr.mxu0 0.0
    %1228 = vmatpush1.msra.mxu0 %v1138
    %1229 = vmatprep.subr.mxu0 0.0
    %1230 = vmatpush1.msra.mxu0 %v1139
    %1231 = vmatprep.subr.mxu0 0.0
    %1232 = vmatpush1.msra.mxu0 %v1140
    %1233 = vmatprep.subr.mxu0 0.0
    %1234 = vmatpush1.msra.mxu0 %v1141
    %1235 = vmatprep.subr.mxu0 0.0
    %1236 = vmatpush1.msra.mxu0 %v1142
    %1237 = vmatprep.subr.mxu0 0.0
    %1238 = vmatpush1.msra.mxu0 %v1143
    %1239 = vmatprep.subr.mxu0 0.0
    %1240 = vmatpush1.msra.mxu0 %v1144
    %1241 = vmatprep.subr.mxu0 0.0
    %1242 = vmatpush1.msra.mxu0 %v1145
    %1243 = vmatprep.subr.mxu0 0.0
    %1244 = vmatpush1.msra.mxu0 %v1146
    %1245 = vmatprep.subr.mxu0 0.0
    %1246 = vmatpush1.msra.mxu0 %v1147
    %1247 = vmatprep.subr.mxu0 0.0
    %1248 = vmatpush1.msra.mxu0 %v1148
    %1249 = vmatprep.mubr.f32.mxu0 %v1101
    %1250 = vmatmul.mubr.f32.gmra.mrb[0].mxu0 %v1053
    %v1251 = vpop.f32.mrb[0].mxu0
    %v1252 = vadd.f32 0.0, %v1251
    %v1253 = vpop.f32.mrb[0].mxu0
    %1254 = vmatprep.mubr.f32.mxu0 %v1102
    %1255 = vmatmul.mubr.f32.gmra.mrb[0].mxu0 %v1054
    %v1256 = vpop.f32.mrb[0].mxu0
    %v1257 = vadd.f32 0.0, %v1256
    %v1258 = vpop.f32.mrb[0].mxu0
    %1259 = vmatprep.mubr.f32.mxu0 %v1103
    %1260 = vmatmul.mubr.f32.gmra.mrb[0].mxu0 %v1055
    %v1261 = vpop.f32.mrb[0].mxu0
    %v1262 = vadd.f32 0.0, %v1261
    %v1263 = vpop.f32.mrb[0].mxu0
    %1264 = vmatprep.mubr.f32.mxu0 %v1104
    %1265 = vmatmul.mubr.f32.gmra.mrb[0].mxu0 %v1056
    %v1266 = vpop.f32.mrb[0].mxu0
    %v1267 = vadd.f32 0.0, %v1266
    %v1268 = vpop.f32.mrb[0].mxu0
    %1269 = vmatprep.mubr.f32.mxu0 %v1105
    %1270 = vmatmul.mubr.f32.gmra.mrb[0].mxu0 %v1057
    %v1271 = vpop.f32.mrb[0].mxu0
    %v1272 = vadd.f32 0.0, %v1271
    %v1273 = vpop.f32.mrb[0].mxu0
    %1274 = vmatprep.mubr.f32.mxu0 %v1106
    %1275 = vmatmul.mubr.f32.gmra.mrb[0].mxu0 %v1058
    %v1276 = vpop.f32.mrb[0].mxu0
    %v1277 = vadd.f32 0.0, %v1276
    %v1278 = vpop.f32.mrb[0].mxu0
    %1279 = vmatprep.mubr.f32.mxu0 %v1107
    %1280 = vmatmul.mubr.f32.gmra.mrb[0].mxu0 %v1059
    %v1281 = vpop.f32.mrb[0].mxu0
    %v1282 = vadd.f32 0.0, %v1281
    %v1283 = vpop.f32.mrb[0].mxu0
    %1284 = vmatprep.mubr.f32.mxu0 %v1108
    %1285 = vmatmul.mubr.f32.gmra.mrb[0].mxu0 %v1060
    %v1286 = vpop.f32.mrb[0].mxu0
    %v1287 = vadd.f32 0.0, %v1286
    %v1288 = vpop.f32.mrb[0].mxu0
    %1289 = vmatprep.mubr.f32.mxu0 %v1109
    %1290 = vmatmul.mubr.f32.gmra.mrb[0].mxu0 %v1061
    %v1291 = vpop.f32.mrb[0].mxu0
    %v1292 = vadd.f32 0.0, %v1291
    %v1293 = vpop.f32.mrb[0].mxu0
    %1294 = vmatprep.mubr.f32.mxu0 %v1110
    %1295 = vmatmul.mubr.f32.gmra.mrb[0].mxu0 %v1062
    %v1296 = vpop.f32.mrb[0].mxu0
    %v1297 = vadd.f32 0.0, %v1296
    %v1298 = vpop.f32.mrb[0].mxu0
    %1299 = vmatprep.mubr.f32.mxu0 %v1111
    %1300 = vmatmul.mubr.f32.gmra.mrb[0].mxu0 %v1063
    %v1301 = vpop.f32.mrb[0].mxu0
    %v1302 = vadd.f32 0.0, %v1301
    %v1303 = vpop.f32.mrb[0].mxu0
    %1304 = vmatprep.mubr.f32.mxu0 %v1112
    %1305 = vmatmul.mubr.f32.gmra.mrb[0].mxu0 %v1064
    %v1306 = vpop.f32.mrb[0].mxu0
    %v1307 = vadd.f32 0.0, %v1306
    %v1308 = vpop.f32.mrb[0].mxu0
    %1309 = vmatprep.mubr.f32.mxu0 %v1113
    %1310 = vmatmul.mubr.f32.gmra.mrb[0].mxu0 %v1065
    %v1311 = vpop.f32.mrb[0].mxu0
    %v1312 = vadd.f32 0.0, %v1311
    %v1313 = vpop.f32.mrb[0].mxu0
    %1314 = vmatprep.mubr.f32.mxu0 %v1114
    %1315 = vmatmul.mubr.f32.gmra.mrb[0].mxu0 %v1066
    %v1316 = vpop.f32.mrb[0].mxu0
    %v1317 = vadd.f32 0.0, %v1316
    %v1318 = vpop.f32.mrb[0].mxu0
    %1319 = vmatprep.mubr.f32.mxu0 %v1115
    %1320 = vmatmul.mubr.f32.gmra.mrb[0].mxu0 %v1067
    %v1321 = vpop.f32.mrb[0].mxu0
    %v1322 = vadd.f32 0.0, %v1321
    %v1323 = vpop.f32.mrb[0].mxu0
    %1324 = vmatprep.mubr.f32.mxu0 %v1116
    %1325 = vmatmul.mubr.f32.gmra.mrb[0].mxu0 %v1068
    %v1326 = vpop.f32.mrb[0].mxu0
    %v1327 = vadd.f32 0.0, %v1326
    %v1328 = vpop.f32.mrb[0].mxu0
    %1329 = vdwg.mxu0
    %1330 = vmatprep.subr.mxu0 0.0
    %1331 = vmatpush1.msra.mxu0 %v1149
    %1332 = vmatprep.subr.mxu0 0.0
    %1333 = vmatpush1.msra.mxu0 %v1150
    %1334 = vmatprep.subr.mxu0 0.0
    %1335 = vmatpush1.msra.mxu0 %v1151
    %1336 = vmatprep.subr.mxu0 0.0
    %1337 = vmatpush1.msra.mxu0 %v1152
    %1338 = vmatprep.subr.mxu0 0.0
    %1339 = vmatpush1.msra.mxu0 0.0
    %1340 = vmatprep.subr.mxu0 0.0
    %1341 = vmatpush1.msra.mxu0 0.0
    %1342 = vmatprep.subr.mxu0 0.0
    %1343 = vmatpush1.msra.mxu0 0.0
    %1344 = vmatprep.subr.mxu0 0.0
    %1345 = vmatpush1.msra.mxu0 0.0
    %1346 = vmatprep.subr.mxu0 0.0
    %1347 = vmatpush1.msra.mxu0 0.0
    %1348 = vmatprep.subr.mxu0 0.0
    %1349 = vmatpush1.msra.mxu0 0.0
    %1350 = vmatprep.subr.mxu0 0.0
    %1351 = vmatpush1.msra.mxu0 0.0
    %1352 = vmatprep.subr.mxu0 0.0
    %1353 = vmatpush1.msra.mxu0 0.0
    %1354 = vmatprep.subr.mxu0 0.0
    %1355 = vmatpush1.msra.mxu0 0.0
    %1356 = vmatprep.subr.mxu0 0.0
    %1357 = vmatpush1.msra.mxu0 0.0
    %1358 = vmatprep.subr.mxu0 0.0
    %1359 = vmatpush1.msra.mxu0 0.0
    %1360 = vmatprep.subr.mxu0 0.0
    %1361 = vmatpush1.msra.mxu0 0.0
    %1362 = vmatprep.subr.mxu0 0.0
    %1363 = vmatpush1.msra.mxu0 0.0
    %1364 = vmatprep.subr.mxu0 0.0
    %1365 = vmatpush1.msra.mxu0 0.0
    %1366 = vmatprep.subr.mxu0 0.0
    %1367 = vmatpush1.msra.mxu0 0.0
    %1368 = vmatprep.subr.mxu0 0.0
    %1369 = vmatpush1.msra.mxu0 0.0
    %1370 = vmatprep.subr.mxu0 0.0
    %1371 = vmatpush1.msra.mxu0 0.0
    %1372 = vmatprep.subr.mxu0 0.0
    %1373 = vmatpush1.msra.mxu0 0.0
    %1374 = vmatprep.subr.mxu0 0.0
    %1375 = vmatpush1.msra.mxu0 0.0
    %1376 = vmatprep.subr.mxu0 0.0
    %1377 = vmatpush1.msra.mxu0 0.0
    %1378 = vmatprep.subr.mxu0 0.0
    %1379 = vmatpush1.msra.mxu0 0.0
    %1380 = vmatprep.subr.mxu0 0.0
    %1381 = vmatpush1.msra.mxu0 0.0
    %1382 = vmatprep.subr.mxu0 0.0
    %1383 = vmatpush1.msra.mxu0 0.0
    %1384 = vmatprep.subr.mxu0 0.0
    %1385 = vmatpush1.msra.mxu0 0.0
    %1386 = vmatprep.subr.mxu0 0.0
    %1387 = vmatpush1.msra.mxu0 0.0
    %1388 = vmatprep.subr.mxu0 0.0
    %1389 = vmatpush1.msra.mxu0 0.0
    %1390 = vmatprep.subr.mxu0 0.0
    %1391 = vmatpush1.msra.mxu0 0.0
    %1392 = vmatprep.subr.mxu0 0.0
    %1393 = vmatpush1.msra.mxu0 0.0
    %1394 = vmatprep.mubr.f32.mxu0 0.0
    %1395 = vmatmul.mubr.f32.gmra.mrb[0].mxu0 %v1153
    %v1396 = vpop.f32.mrb[0].mxu0
    %v1397 = vadd.f32 %v1252, %v1396
    %v1398 = vpop.f32.mrb[0].mxu0
    %1399 = vmatprep.mubr.f32.mxu0 0.0
    %1400 = vmatmul.mubr.f32.gmra.mrb[0].mxu0 %v1155
    %v1401 = vpop.f32.mrb[0].mxu0
    %v1402 = vadd.f32 %v1257, %v1401
    %v1403 = vpop.f32.mrb[0].mxu0
    %1404 = vmatprep.mubr.f32.mxu0 0.0
    %1405 = vmatmul.mubr.f32.gmra.mrb[0].mxu0 %v1157
    %v1406 = vpop.f32.mrb[0].mxu0
    %v1407 = vadd.f32 %v1262, %v1406
    %v1408 = vpop.f32.mrb[0].mxu0
    %1409 = vmatprep.mubr.f32.mxu0 0.0
    %1410 = vmatmul.mubr.f32.gmra.mrb[0].mxu0 %v1159
    %v1411 = vpop.f32.mrb[0].mxu0
    %v1412 = vadd.f32 %v1267, %v1411
    %v1413 = vpop.f32.mrb[0].mxu0
    %1414 = vmatprep.mubr.f32.mxu0 0.0
    %1415 = vmatmul.mubr.f32.gmra.mrb[0].mxu0 %v1161
    %v1416 = vpop.f32.mrb[0].mxu0
    %v1417 = vadd.f32 %v1272, %v1416
    %v1418 = vpop.f32.mrb[0].mxu0
    %1419 = vmatprep.mubr.f32.mxu0 0.0
    %1420 = vmatmul.mubr.f32.gmra.mrb[0].mxu0 %v1163
    %v1421 = vpop.f32.mrb[0].mxu0
    %v1422 = vadd.f32 %v1277, %v1421
    %v1423 = vpop.f32.mrb[0].mxu0
    %1424 = vmatprep.mubr.f32.mxu0 0.0
    %1425 = vmatmul.mubr.f32.gmra.mrb[0].mxu0 %v1165
    %v1426 = vpop.f32.mrb[0].mxu0
    %v1427 = vadd.f32 %v1282, %v1426
    %v1428 = vpop.f32.mrb[0].mxu0
    %1429 = vmatprep.mubr.f32.mxu0 0.0
    %1430 = vmatmul.mubr.f32.gmra.mrb[0].mxu0 %v1167
    %v1431 = vpop.f32.mrb[0].mxu0
    %v1432 = vadd.f32 %v1287, %v1431
    %v1433 = vpop.f32.mrb[0].mxu0
    %1434 = vmatprep.mubr.f32.mxu0 0.0
    %1435 = vmatmul.mubr.f32.gmra.mrb[0].mxu0 %v1169
    %v1436 = vpop.f32.mrb[0].mxu0
    %v1437 = vadd.f32 %v1292, %v1436
    %v1438 = vpop.f32.mrb[0].mxu0
    %1439 = vmatprep.mubr.f32.mxu0 0.0
    %1440 = vmatmul.mubr.f32.gmra.mrb[0].mxu0 %v1171
    %v1441 = vpop.f32.mrb[0].mxu0
    %v1442 = vadd.f32 %v1297, %v1441
    %v1443 = vpop.f32.mrb[0].mxu0
    %1444 = vmatprep.mubr.f32.mxu0 0.0
    %1445 = vmatmul.mubr.f32.gmra.mrb[0].mxu0 %v1173
    %v1446 = vpop.f32.mrb[0].mxu0
    %v1447 = vadd.f32 %v1302, %v1446
    %v1448 = vpop.f32.mrb[0].mxu0
    %1449 = vmatprep.mubr.f32.mxu0 0.0
    %1450 = vmatmul.mubr.f32.gmra.mrb[0].mxu0 %v1175
    %v1451 = vpop.f32.mrb[0].mxu0
    %v1452 = vadd.f32 %v1307, %v1451
    %v1453 = vpop.f32.mrb[0].mxu0
    %1454 = vmatprep.mubr.f32.mxu0 0.0
    %1455 = vmatmul.mubr.f32.gmra.mrb[0].mxu0 %v1177
    %v1456 = vpop.f32.mrb[0].mxu0
    %v1457 = vadd.f32 %v1312, %v1456
    %v1458 = vpop.f32.mrb[0].mxu0
    %1459 = vmatprep.mubr.f32.mxu0 0.0
    %1460 = vmatmul.mubr.f32.gmra.mrb[0].mxu0 %v1179
    %v1461 = vpop.f32.mrb[0].mxu0
    %v1462 = vadd.f32 %v1317, %v1461
    %v1463 = vpop.f32.mrb[0].mxu0
    %1464 = vmatprep.mubr.f32.mxu0 0.0
    %1465 = vmatmul.mubr.f32.gmra.mrb[0].mxu0 %v1181
    %v1466 = vpop.f32.mrb[0].mxu0
    %v1467 = vadd.f32 %v1322, %v1466
    %v1468 = vpop.f32.mrb[0].mxu0
    %1469 = vmatprep.mubr.f32.mxu0 0.0
    %1470 = vmatmul.mubr.f32.gmra.mrb[0].mxu0 %v1183
    %v1471 = vpop.f32.mrb[0].mxu0
    %v1472 = vadd.f32 %v1327, %v1471
    %v1473 = vpop.f32.mrb[0].mxu0
    %1474 = vdwg.mxu0
    %1491 = vrot.lane.b32.xlu0 %v1397, 16
    %v1492 = vpop.permute.xlu0 %1491
    %1493 = vrot.lane.b32.xlu0 %v1402, 16
    %v1494 = vpop.permute.xlu0 %1493
    %1495 = vrot.lane.b32.xlu0 %v1407, 16
    %v1496 = vpop.permute.xlu0 %1495
    %1497 = vrot.lane.b32.xlu0 %v1412, 16
    %v1498 = vpop.permute.xlu0 %1497
    %1499 = vrot.lane.b32.xlu0 %v1417, 16
    %v1500 = vpop.permute.xlu0 %1499
    %1501 = vrot.lane.b32.xlu0 %v1422, 16
    %v1502 = vpop.permute.xlu0 %1501
    %1503 = vrot.lane.b32.xlu0 %v1427, 16
    %v1504 = vpop.permute.xlu0 %1503
    %1505 = vrot.lane.b32.xlu0 %v1432, 16
    %v1506 = vpop.permute.xlu0 %1505
    %1507 = vrot.lane.b32.xlu0 %v1437, 16
    %v1508 = vpop.permute.xlu0 %1507
    %1509 = vrot.lane.b32.xlu0 %v1442, 16
    %v1510 = vpop.permute.xlu0 %1509
    %1511 = vrot.lane.b32.xlu0 %v1447, 16
    %v1512 = vpop.permute.xlu0 %1511
    %1513 = vrot.lane.b32.xlu0 %v1452, 16
    %v1514 = vpop.permute.xlu0 %1513
    %1515 = vrot.lane.b32.xlu0 %v1457, 16
    %v1516 = vpop.permute.xlu0 %1515
    %1517 = vrot.lane.b32.xlu0 %v1462, 16
    %v1518 = vpop.permute.xlu0 %1517
    %1519 = vrot.lane.b32.xlu0 %v1467, 16
    %v1520 = vpop.permute.xlu0 %1519
    %1521 = vrot.lane.b32.xlu0 %v1472, 16
    %v1522 = vpop.permute.xlu0 %1521
    %vm1539 = vcmask 130048
    %v1540 = vsel %vm1539, %v438, %v1492
    %v1541 = vsel %vm1539, %v443, %v1494
    %v1542 = vsel %vm1539, %v448, %v1496
    %v1543 = vsel %vm1539, %v453, %v1498
    %v1544 = vsel %vm1539, %v458, %v1500
    %v1545 = vsel %vm1539, %v463, %v1502
    %v1546 = vsel %vm1539, %v468, %v1504
    %v1547 = vsel %vm1539, %v473, %v1506
    %v1548 = vsel %vm1539, %v478, %v1508
    %v1549 = vsel %vm1539, %v483, %v1510
    %v1550 = vsel %vm1539, %v488, %v1512
    %v1551 = vsel %vm1539, %v493, %v1514
    %v1552 = vsel %vm1539, %v498, %v1516
    %v1553 = vsel %vm1539, %v503, %v1518
    %v1554 = vsel %vm1539, %v508, %v1520
    %v1555 = vsel %vm1539, %v513, %v1522
    %v1556 = vld [vmem:[%s5] sm:$0x1]
    %v1558 = vlaneseq
    %v1559 = vshrl.u32 %v1558, 7
    %v1560 = vsub.s32 0, %v1559
    %v1561 = vrot.slane %v1556, %v1560
    %v1563 = vmul.f32 %v1540, %v1561
    %v1564 = vmul.f32 %v1541, %v1561
    %v1565 = vmul.f32 %v1542, %v1561
    %v1566 = vmul.f32 %v1543, %v1561
    %v1567 = vmul.f32 %v1544, %v1561
    %v1568 = vmul.f32 %v1545, %v1561
    %v1569 = vmul.f32 %v1546, %v1561
    %v1570 = vmul.f32 %v1547, %v1561
    %v1571 = vmul.f32 %v1548, %v1561
    %v1572 = vmul.f32 %v1549, %v1561
    %v1573 = vmul.f32 %v1550, %v1561
    %v1574 = vmul.f32 %v1551, %v1561
    %v1575 = vmul.f32 %v1552, %v1561
    %v1576 = vmul.f32 %v1553, %v1561
    %v1577 = vmul.f32 %v1554, %v1561
    %v1578 = vmul.f32 %v1555, %v1561
    %v1579 = vld [vmem:[%s6] sm:$0x1]
    %v1581 = vlaneseq
    %v1582 = vshrl.u32 %v1581, 7
    %v1583 = vsub.s32 0, %v1582
    %v1584 = vrot.slane %v1579, %v1583
    %v1586 = vadd.f32 %v1563, %v1584
    %v1587 = vadd.f32 %v1564, %v1584
    %v1588 = vadd.f32 %v1565, %v1584
    %v1589 = vadd.f32 %v1566, %v1584
    %v1590 = vadd.f32 %v1567, %v1584
    %v1591 = vadd.f32 %v1568, %v1584
    %v1592 = vadd.f32 %v1569, %v1584
    %v1593 = vadd.f32 %v1570, %v1584
    %v1594 = vadd.f32 %v1571, %v1584
    %v1595 = vadd.f32 %v1572, %v1584
    %v1596 = vadd.f32 %v1573, %v1584
    %v1597 = vadd.f32 %v1574, %v1584
    %v1598 = vadd.f32 %v1575, %v1584
    %v1599 = vadd.f32 %v1576, %v1584
    %v1600 = vadd.f32 %v1577, %v1584
    %v1601 = vadd.f32 %v1578, %v1584
    %v1602 = vlaneseq
    %v1603 = vand.u32 %v1602, 127
    %vm1604 = vcmp.ge.s32.totalorder %v1603, 16
    %v1605 = vxor.u32 %v1586, 2147483648
    %v1606 = vxor.u32 %v1587, 2147483648
    %v1607 = vxor.u32 %v1588, 2147483648
    %v1608 = vxor.u32 %v1589, 2147483648
    %v1609 = vxor.u32 %v1590, 2147483648
    %v1610 = vxor.u32 %v1591, 2147483648
    %v1611 = vxor.u32 %v1592, 2147483648
    %v1612 = vxor.u32 %v1593, 2147483648
    %v1613 = vxor.u32 %v1594, 2147483648
    %v1614 = vxor.u32 %v1595, 2147483648
    %v1615 = vxor.u32 %v1596, 2147483648
    %v1616 = vxor.u32 %v1597, 2147483648
    %v1617 = vxor.u32 %v1598, 2147483648
    %v1618 = vxor.u32 %v1599, 2147483648
    %v1619 = vxor.u32 %v1600, 2147483648
    %v1620 = vxor.u32 %v1601, 2147483648
    %v1621 = vmul.f32 %v1605, 1.442695
    %v1622 = vpow.pop %v1621
    %v1623 = vmul.f32 %v1606, 1.442695
    %v1624 = vpow.pop %v1623
    %v1625 = vmul.f32 %v1607, 1.442695
    %v1626 = vpow.pop %v1625
    %v1627 = vmul.f32 %v1608, 1.442695
    %v1628 = vpow.pop %v1627
    %v1629 = vmul.f32 %v1609, 1.442695
    %v1630 = vpow.pop %v1629
    %v1631 = vmul.f32 %v1610, 1.442695
    %v1632 = vpow.pop %v1631
    %v1633 = vmul.f32 %v1611, 1.442695
    %v1634 = vpow.pop %v1633
    %v1635 = vmul.f32 %v1612, 1.442695
    %v1636 = vpow.pop %v1635
    %v1637 = vmul.f32 %v1613, 1.442695
    %v1638 = vpow.pop %v1637
    %v1639 = vmul.f32 %v1614, 1.442695
    %v1640 = vpow.pop %v1639
    %v1641 = vmul.f32 %v1615, 1.442695
    %v1642 = vpow.pop %v1641
    %v1643 = vmul.f32 %v1616, 1.442695
    %v1644 = vpow.pop %v1643
    %v1645 = vmul.f32 %v1617, 1.442695
    %v1646 = vpow.pop %v1645
    %v1647 = vmul.f32 %v1618, 1.442695
    %v1648 = vpow.pop %v1647
    %v1649 = vmul.f32 %v1619, 1.442695
    %v1650 = vpow.pop %v1649
    %v1651 = vmul.f32 %v1620, 1.442695
    %v1652 = vpow.pop %v1651
    %v1653 = vadd.f32 %v1622, 1.0
    %v1654 = vadd.f32 %v1624, 1.0
    %v1655 = vadd.f32 %v1626, 1.0
    %v1656 = vadd.f32 %v1628, 1.0
    %v1657 = vadd.f32 %v1630, 1.0
    %v1658 = vadd.f32 %v1632, 1.0
    %v1659 = vadd.f32 %v1634, 1.0
    %v1660 = vadd.f32 %v1636, 1.0
    %v1661 = vadd.f32 %v1638, 1.0
    %v1662 = vadd.f32 %v1640, 1.0
    %v1663 = vadd.f32 %v1642, 1.0
    %v1664 = vadd.f32 %v1644, 1.0
    %v1665 = vadd.f32 %v1646, 1.0
    %v1666 = vadd.f32 %v1648, 1.0
    %v1667 = vadd.f32 %v1650, 1.0
    %v1668 = vadd.f32 %v1652, 1.0
    %v1669 = vrcp.pop %v1653
    %v1670 = vmul.f32 1.0, %v1669
    %v1671 = vrcp.pop %v1654
    %v1672 = vmul.f32 1.0, %v1671
    %v1673 = vrcp.pop %v1655
    %v1674 = vmul.f32 1.0, %v1673
    %v1675 = vrcp.pop %v1656
    %v1676 = vmul.f32 1.0, %v1675
    %v1677 = vrcp.pop %v1657
    %v1678 = vmul.f32 1.0, %v1677
    %v1679 = vrcp.pop %v1658
    %v1680 = vmul.f32 1.0, %v1679
    %v1681 = vrcp.pop %v1659
    %v1682 = vmul.f32 1.0, %v1681
    %v1683 = vrcp.pop %v1660
    %v1684 = vmul.f32 1.0, %v1683
    %v1685 = vrcp.pop %v1661
    %v1686 = vmul.f32 1.0, %v1685
    %v1687 = vrcp.pop %v1662
    %v1688 = vmul.f32 1.0, %v1687
    %v1689 = vrcp.pop %v1663
    %v1690 = vmul.f32 1.0, %v1689
    %v1691 = vrcp.pop %v1664
    %v1692 = vmul.f32 1.0, %v1691
    %v1693 = vrcp.pop %v1665
    %v1694 = vmul.f32 1.0, %v1693
    %v1695 = vrcp.pop %v1666
    %v1696 = vmul.f32 1.0, %v1695
    %v1697 = vrcp.pop %v1667
    %v1698 = vmul.f32 1.0, %v1697
    %v1699 = vrcp.pop %v1668
    %v1700 = vmul.f32 1.0, %v1699
    %v1701 = vmul.f32 %v1586, %v1670
    %v1702 = vmul.f32 %v1587, %v1672
    %v1703 = vmul.f32 %v1588, %v1674
    %v1704 = vmul.f32 %v1589, %v1676
    %v1705 = vmul.f32 %v1590, %v1678
    %v1706 = vmul.f32 %v1591, %v1680
    %v1707 = vmul.f32 %v1592, %v1682
    %v1708 = vmul.f32 %v1593, %v1684
    %v1709 = vmul.f32 %v1594, %v1686
    %v1710 = vmul.f32 %v1595, %v1688
    %v1711 = vmul.f32 %v1596, %v1690
    %v1712 = vmul.f32 %v1597, %v1692
    %v1713 = vmul.f32 %v1598, %v1694
    %v1714 = vmul.f32 %v1599, %v1696
    %v1715 = vmul.f32 %v1600, %v1698
    %v1716 = vmul.f32 %v1601, %v1700
    %v1717 = vsel %vm1604, %v1701, %v1586
    %v1718 = vsel %vm1604, %v1702, %v1587
    %v1719 = vsel %vm1604, %v1703, %v1588
    %v1720 = vsel %vm1604, %v1704, %v1589
    %v1721 = vsel %vm1604, %v1705, %v1590
    %v1722 = vsel %vm1604, %v1706, %v1591
    %v1723 = vsel %vm1604, %v1707, %v1592
    %v1724 = vsel %vm1604, %v1708, %v1593
    %v1725 = vsel %vm1604, %v1709, %v1594
    %v1726 = vsel %vm1604, %v1710, %v1595
    %v1727 = vsel %vm1604, %v1711, %v1596
    %v1728 = vsel %vm1604, %v1712, %v1597
    %v1729 = vsel %vm1604, %v1713, %v1598
    %v1730 = vsel %vm1604, %v1714, %v1599
    %v1731 = vsel %vm1604, %v1715, %v1600
    %v1732 = vsel %vm1604, %v1716, %v1601
    %1733 = vst.msk [vmem:[#allocation2] sm:$0xff] %vm304, 0.0
    %vm1734 = vcmask 254976
    %1735 = vst.msk [vmem:[#allocation2 + $0x8] sm:$0x3] %vm1734, 0.0
    %1736 = vst.msk [vmem:[#allocation2 + $0x10] sm:$0xff] %vm304, 0.0
    %1737 = vst.msk [vmem:[#allocation2 + $0x18] sm:$0x3] %vm1734, 0.0
    %1738 = vst.msk [vmem:[#allocation2 + $0x20] sm:$0xff] %vm304, 0.0
    %1739 = vst.msk [vmem:[#allocation2 + $0x28] sm:$0x3] %vm1734, 0.0
    %1740 = vst.msk [vmem:[#allocation2 + $0x30] sm:$0xff] %vm304, 0.0
    %1741 = vst.msk [vmem:[#allocation2 + $0x38] sm:$0x3] %vm1734, 0.0
    %1742 = vst.msk [vmem:[#allocation2 + $0x40] sm:$0xff] %vm304, 0.0
    %1743 = vst.msk [vmem:[#allocation2 + $0x48] sm:$0x3] %vm1734, 0.0
    %1744 = vst.msk [vmem:[#allocation2 + $0x50] sm:$0xff] %vm304, 0.0
    %1745 = vst.msk [vmem:[#allocation2 + $0x58] sm:$0x3] %vm1734, 0.0
    %1746 = vst.msk [vmem:[#allocation2 + $0x60] sm:$0xff] %vm304, 0.0
    %1747 = vst.msk [vmem:[#allocation2 + $0x68] sm:$0x3] %vm1734, 0.0
    %1748 = vst.msk [vmem:[#allocation2 + $0x70] sm:$0xff] %vm304, 0.0
    %1749 = vst.msk [vmem:[#allocation2 + $0x78] sm:$0x3] %vm1734, 0.0
    %1750 = vst.msk [vmem:[#allocation2 + $0x80] sm:$0xff] %vm304, 0.0
    %1751 = vst.msk [vmem:[#allocation2 + $0x88] sm:$0x3] %vm1734, 0.0
    %1752 = vst.msk [vmem:[#allocation2 + $0x90] sm:$0xff] %vm304, 0.0
    %1753 = vst.msk [vmem:[#allocation2 + $0x98] sm:$0x3] %vm1734, 0.0
    %1754 = vst.msk [vmem:[#allocation2 + $0xa0] sm:$0xff] %vm304, 0.0
    %1755 = vst.msk [vmem:[#allocation2 + $0xa8] sm:$0x3] %vm1734, 0.0
    %1756 = vst.msk [vmem:[#allocation2 + $0xb0] sm:$0xff] %vm304, 0.0
    %1757 = vst.msk [vmem:[#allocation2 + $0xb8] sm:$0x3] %vm1734, 0.0
    %1758 = vst.msk [vmem:[#allocation2 + $0xc0] sm:$0xff] %vm304, 0.0
    %1759 = vst.msk [vmem:[#allocation2 + $0xc8] sm:$0x3] %vm1734, 0.0
    %1760 = vst.msk [vmem:[#allocation2 + $0xd0] sm:$0xff] %vm304, 0.0
    %1761 = vst.msk [vmem:[#allocation2 + $0xd8] sm:$0x3] %vm1734, 0.0
    %1762 = vst.msk [vmem:[#allocation2 + $0xe0] sm:$0xff] %vm304, 0.0
    %1763 = vst.msk [vmem:[#allocation2 + $0xe8] sm:$0x3] %vm1734, 0.0
    %1764 = vst.msk [vmem:[#allocation2 + $0xf0] sm:$0xff] %vm304, 0.0
    %1765 = vst.msk [vmem:[#allocation2 + $0xf8] sm:$0x3] %vm1734, 0.0
    %1766 = vst.msk [vmem:[#allocation2 + $0x100] sm:$0xff] %vm304, 0.0
    %1767 = vst.msk [vmem:[#allocation2 + $0x108] sm:$0x3] %vm1734, 0.0
    %1768 = vst.msk [vmem:[#allocation2 + $0x110] sm:$0xff] %vm304, 0.0
    %1769 = vst.msk [vmem:[#allocation2 + $0x118] sm:$0x3] %vm1734, 0.0
    %1770 = vst.msk [vmem:[#allocation2 + $0x120] sm:$0xff] %vm304, 0.0
    %1771 = vst.msk [vmem:[#allocation2 + $0x128] sm:$0x3] %vm1734, 0.0
    %1772 = vst.msk [vmem:[#allocation2 + $0x130] sm:$0xff] %vm304, 0.0
    %1773 = vst.msk [vmem:[#allocation2 + $0x138] sm:$0x3] %vm1734, 0.0
    %s1774 = scalar_lea.vmem [#allocation2], 16
    %1775 = vst.msk [vmem:[%s1774 + $0x1] sm:$0xff] %vm304, %v1717
    %1776 = vst.msk [vmem:[%s1774 + $0x11] sm:$0xff] %vm304, %v1718
    %1777 = vst.msk [vmem:[%s1774 + $0x21] sm:$0xff] %vm304, %v1719
    %1778 = vst.msk [vmem:[%s1774 + $0x31] sm:$0xff] %vm304, %v1720
    %1779 = vst.msk [vmem:[%s1774 + $0x41] sm:$0xff] %vm304, %v1721
    %1780 = vst.msk [vmem:[%s1774 + $0x51] sm:$0xff] %vm304, %v1722
    %1781 = vst.msk [vmem:[%s1774 + $0x61] sm:$0xff] %vm304, %v1723
    %1782 = vst.msk [vmem:[%s1774 + $0x71] sm:$0xff] %vm304, %v1724
    %1783 = vst.msk [vmem:[%s1774 + $0xa1] sm:$0xff] %vm304, %v1725
    %1784 = vst.msk [vmem:[%s1774 + $0xb1] sm:$0xff] %vm304, %v1726
    %1785 = vst.msk [vmem:[%s1774 + $0xc1] sm:$0xff] %vm304, %v1727
    %1786 = vst.msk [vmem:[%s1774 + $0xd1] sm:$0xff] %vm304, %v1728
    %1787 = vst.msk [vmem:[%s1774 + $0xe1] sm:$0xff] %vm304, %v1729
    %1788 = vst.msk [vmem:[%s1774 + $0xf1] sm:$0xff] %vm304, %v1730
    %1789 = vst.msk [vmem:[%s1774 + $0x101] sm:$0xff] %vm304, %v1731
    %1790 = vst.msk [vmem:[%s1774 + $0x111] sm:$0xff] %vm304, %v1732
    %v1791 = vld [vmem:[#allocation2] sm:$0xff]
    %v1792 = vld [vmem:[#allocation2 + $0x8] sm:$0x3]
    %v1793 = vld [vmem:[#allocation2 + $0x10] sm:$0xff]
    %v1794 = vld [vmem:[#allocation2 + $0x18] sm:$0x3]
    %v1795 = vld [vmem:[#allocation2 + $0x20] sm:$0xff]
    %v1796 = vld [vmem:[#allocation2 + $0x28] sm:$0x3]
    %v1797 = vld [vmem:[#allocation2 + $0x30] sm:$0xff]
    %v1798 = vld [vmem:[#allocation2 + $0x38] sm:$0x3]
    %v1799 = vld [vmem:[#allocation2 + $0x40] sm:$0xff]
    %v1800 = vld [vmem:[#allocation2 + $0x48] sm:$0x3]
    %v1801 = vld [vmem:[#allocation2 + $0x50] sm:$0xff]
    %v1802 = vld [vmem:[#allocation2 + $0x58] sm:$0x3]
    %v1803 = vld [vmem:[#allocation2 + $0x60] sm:$0xff]
    %v1804 = vld [vmem:[#allocation2 + $0x68] sm:$0x3]
    %v1805 = vld [vmem:[#allocation2 + $0x70] sm:$0xff]
    %v1806 = vld [vmem:[#allocation2 + $0x78] sm:$0x3]
    %v1807 = vld [vmem:[#allocation2 + $0x80] sm:$0xff]
    %v1808 = vld [vmem:[#allocation2 + $0x88] sm:$0x3]
    %v1809 = vld [vmem:[#allocation2 + $0x90] sm:$0xff]
    %v1810 = vld [vmem:[#allocation2 + $0x98] sm:$0x3]
    %v1811 = vld [vmem:[#allocation2 + $0xa0] sm:$0xff]
    %v1812 = vld [vmem:[#allocation2 + $0xa8] sm:$0x3]
    %v1813 = vld [vmem:[#allocation2 + $0xb0] sm:$0xff]
    %v1814 = vld [vmem:[#allocation2 + $0xb8] sm:$0x3]
    %v1815 = vld [vmem:[#allocation2 + $0xc0] sm:$0xff]
    %v1816 = vld [vmem:[#allocation2 + $0xc8] sm:$0x3]
    %v1817 = vld [vmem:[#allocation2 + $0xd0] sm:$0xff]
    %v1818 = vld [vmem:[#allocation2 + $0xd8] sm:$0x3]
    %v1819 = vld [vmem:[#allocation2 + $0xe0] sm:$0xff]
    %v1820 = vld [vmem:[#allocation2 + $0xe8] sm:$0x3]
    %v1821 = vld [vmem:[#allocation2 + $0xf0] sm:$0xff]
    %v1822 = vld [vmem:[#allocation2 + $0xf8] sm:$0x3]
    %v1823 = vld [vmem:[#allocation2 + $0x100] sm:$0xff]
    %v1824 = vld [vmem:[#allocation2 + $0x108] sm:$0x3]
    %v1825 = vld [vmem:[#allocation2 + $0x110] sm:$0xff]
    %v1826 = vld [vmem:[#allocation2 + $0x118] sm:$0x3]
    %v1827 = vld [vmem:[#allocation2 + $0x120] sm:$0xff]
    %v1828 = vld [vmem:[#allocation2 + $0x128] sm:$0x3]
    %v1829 = vld [vmem:[#allocation2 + $0x130] sm:$0xff]
    %v1830 = vld [vmem:[#allocation2 + $0x138] sm:$0x3]
    %v1863 = vrot.slane %v1791, 1
    %v1864 = vrot.slane %v1792, 1
    %v1865 = vsel %vm101, %v1863, %v1864
    %v1866 = vrot.slane %v1793, 1
    %v1867 = vrot.slane %v1794, 1
    %v1868 = vsel %vm101, %v1866, %v1867
    %v1869 = vrot.slane %v1795, 1
    %v1870 = vrot.slane %v1796, 1
    %v1871 = vsel %vm101, %v1869, %v1870
    %v1872 = vrot.slane %v1797, 1
    %v1873 = vrot.slane %v1798, 1
    %v1874 = vsel %vm101, %v1872, %v1873
    %v1875 = vrot.slane %v1799, 1
    %v1876 = vrot.slane %v1800, 1
    %v1877 = vsel %vm101, %v1875, %v1876
    %v1878 = vrot.slane %v1801, 1
    %v1879 = vrot.slane %v1802, 1
    %v1880 = vsel %vm101, %v1878, %v1879
    %v1881 = vrot.slane %v1803, 1
    %v1882 = vrot.slane %v1804, 1
    %v1883 = vsel %vm101, %v1881, %v1882
    %v1884 = vrot.slane %v1805, 1
    %v1885 = vrot.slane %v1806, 1
    %v1886 = vsel %vm101, %v1884, %v1885
    %v1887 = vrot.slane %v1811, 1
    %v1888 = vrot.slane %v1812, 1
    %v1889 = vsel %vm101, %v1887, %v1888
    %v1890 = vrot.slane %v1813, 1
    %v1891 = vrot.slane %v1814, 1
    %v1892 = vsel %vm101, %v1890, %v1891
    %v1893 = vrot.slane %v1815, 1
    %v1894 = vrot.slane %v1816, 1
    %v1895 = vsel %vm101, %v1893, %v1894
    %v1896 = vrot.slane %v1817, 1
    %v1897 = vrot.slane %v1818, 1
    %v1898 = vsel %vm101, %v1896, %v1897
    %v1899 = vrot.slane %v1819, 1
    %v1900 = vrot.slane %v1820, 1
    %v1901 = vsel %vm101, %v1899, %v1900
    %v1902 = vrot.slane %v1821, 1
    %v1903 = vrot.slane %v1822, 1
    %v1904 = vsel %vm101, %v1902, %v1903
    %v1905 = vrot.slane %v1823, 1
    %v1906 = vrot.slane %v1824, 1
    %v1907 = vsel %vm101, %v1905, %v1906
    %v1908 = vrot.slane %v1825, 1
    %v1909 = vrot.slane %v1826, 1
    %v1910 = vsel %vm101, %v1908, %v1909
    %1911 = vrot.lane.b32.xlu0 %v1865, 32
    %v1912 = vpop.permute.xlu0 %1911
    %1913 = vrot.lane.b32.xlu0 %v1868, 32
    %v1914 = vpop.permute.xlu0 %1913
    %1915 = vrot.lane.b32.xlu0 %v1871, 32
    %v1916 = vpop.permute.xlu0 %1915
    %1917 = vrot.lane.b32.xlu0 %v1874, 32
    %v1918 = vpop.permute.xlu0 %1917
    %1919 = vrot.lane.b32.xlu0 %v1877, 32
    %v1920 = vpop.permute.xlu0 %1919
    %1921 = vrot.lane.b32.xlu0 %v1880, 32
    %v1922 = vpop.permute.xlu0 %1921
    %1923 = vrot.lane.b32.xlu0 %v1883, 32
    %v1924 = vpop.permute.xlu0 %1923
    %1925 = vrot.lane.b32.xlu0 %v1886, 32
    %v1926 = vpop.permute.xlu0 %1925
    %1927 = vrot.lane.b32.xlu0 %v1889, 32
    %v1928 = vpop.permute.xlu0 %1927
    %1929 = vrot.lane.b32.xlu0 %v1892, 32
    %v1930 = vpop.permute.xlu0 %1929
    %1931 = vrot.lane.b32.xlu0 %v1895, 32
    %v1932 = vpop.permute.xlu0 %1931
    %1933 = vrot.lane.b32.xlu0 %v1898, 32
    %v1934 = vpop.permute.xlu0 %1933
    %1935 = vrot.lane.b32.xlu0 %v1901, 32
    %v1936 = vpop.permute.xlu0 %1935
    %1937 = vrot.lane.b32.xlu0 %v1904, 32
    %v1938 = vpop.permute.xlu0 %1937
    %1939 = vrot.lane.b32.xlu0 %v1907, 32
    %v1940 = vpop.permute.xlu0 %1939
    %1941 = vrot.lane.b32.xlu0 %v1910, 32
    %v1942 = vpop.permute.xlu0 %1941
    %v1959 = vrot.slane %v1791, 2
    %v1960 = vrot.slane %v1792, 2
    %v1961 = vsel %vm684, %v1959, %v1960
    %v1962 = vrot.slane %v1793, 2
    %v1963 = vrot.slane %v1794, 2
    %v1964 = vsel %vm684, %v1962, %v1963
    %v1965 = vrot.slane %v1795, 2
    %v1966 = vrot.slane %v1796, 2
    %v1967 = vsel %vm684, %v1965, %v1966
    %v1968 = vrot.slane %v1797, 2
    %v1969 = vrot.slane %v1798, 2
    %v1970 = vsel %vm684, %v1968, %v1969
    %v1971 = vrot.slane %v1799, 2
    %v1972 = vrot.slane %v1800, 2
    %v1973 = vsel %vm684, %v1971, %v1972
    %v1974 = vrot.slane %v1801, 2
    %v1975 = vrot.slane %v1802, 2
    %v1976 = vsel %vm684, %v1974, %v1975
    %v1977 = vrot.slane %v1803, 2
    %v1978 = vrot.slane %v1804, 2
    %v1979 = vsel %vm684, %v1977, %v1978
    %v1980 = vrot.slane %v1805, 2
    %v1981 = vrot.slane %v1806, 2
    %v1982 = vsel %vm684, %v1980, %v1981
    %v1983 = vrot.slane %v1811, 2
    %v1984 = vrot.slane %v1812, 2
    %v1985 = vsel %vm684, %v1983, %v1984
    %v1986 = vrot.slane %v1813, 2
    %v1987 = vrot.slane %v1814, 2
    %v1988 = vsel %vm684, %v1986, %v1987
    %v1989 = vrot.slane %v1815, 2
    %v1990 = vrot.slane %v1816, 2
    %v1991 = vsel %vm684, %v1989, %v1990
    %v1992 = vrot.slane %v1817, 2
    %v1993 = vrot.slane %v1818, 2
    %v1994 = vsel %vm684, %v1992, %v1993
    %v1995 = vrot.slane %v1819, 2
    %v1996 = vrot.slane %v1820, 2
    %v1997 = vsel %vm684, %v1995, %v1996
    %v1998 = vrot.slane %v1821, 2
    %v1999 = vrot.slane %v1822, 2
    %v2000 = vsel %vm684, %v1998, %v1999
    %v2001 = vrot.slane %v1823, 2
    %v2002 = vrot.slane %v1824, 2
    %v2003 = vsel %vm684, %v2001, %v2002
    %v2004 = vrot.slane %v1825, 2
    %v2005 = vrot.slane %v1826, 2
    %v2006 = vsel %vm684, %v2004, %v2005
    %2007 = vrot.lane.b32.xlu0 %v1961, 64
    %v2008 = vpop.permute.xlu0 %2007
    %2009 = vrot.lane.b32.xlu0 %v1964, 64
    %v2010 = vpop.permute.xlu0 %2009
    %2011 = vrot.lane.b32.xlu0 %v1967, 64
    %v2012 = vpop.permute.xlu0 %2011
    %2013 = vrot.lane.b32.xlu0 %v1970, 64
    %v2014 = vpop.permute.xlu0 %2013
    %2015 = vrot.lane.b32.xlu0 %v1973, 64
    %v2016 = vpop.permute.xlu0 %2015
    %2017 = vrot.lane.b32.xlu0 %v1976, 64
    %v2018 = vpop.permute.xlu0 %2017
    %2019 = vrot.lane.b32.xlu0 %v1979, 64
    %v2020 = vpop.permute.xlu0 %2019
    %2021 = vrot.lane.b32.xlu0 %v1982, 64
    %v2022 = vpop.permute.xlu0 %2021
    %2023 = vrot.lane.b32.xlu0 %v1985, 64
    %v2024 = vpop.permute.xlu0 %2023
    %2025 = vrot.lane.b32.xlu0 %v1988, 64
    %v2026 = vpop.permute.xlu0 %2025
    %2027 = vrot.lane.b32.xlu0 %v1991, 64
    %v2028 = vpop.permute.xlu0 %2027
    %2029 = vrot.lane.b32.xlu0 %v1994, 64
    %v2030 = vpop.permute.xlu0 %2029
    %2031 = vrot.lane.b32.xlu0 %v1997, 64
    %v2032 = vpop.permute.xlu0 %2031
    %2033 = vrot.lane.b32.xlu0 %v2000, 64
    %v2034 = vpop.permute.xlu0 %2033
    %2035 = vrot.lane.b32.xlu0 %v2003, 64
    %v2036 = vpop.permute.xlu0 %2035
    %2037 = vrot.lane.b32.xlu0 %v2006, 64
    %v2038 = vpop.permute.xlu0 %2037
    %2057 = vrot.lane.b32.xlu0 %v1793, 96
    %v2058 = vpop.permute.xlu0 %2057
    %2059 = vrot.lane.b32.xlu0 %v1795, 96
    %v2060 = vpop.permute.xlu0 %2059
    %2061 = vrot.lane.b32.xlu0 %v1797, 96
    %v2062 = vpop.permute.xlu0 %2061
    %2063 = vrot.lane.b32.xlu0 %v1799, 96
    %v2064 = vpop.permute.xlu0 %2063
    %2065 = vrot.lane.b32.xlu0 %v1801, 96
    %v2066 = vpop.permute.xlu0 %2065
    %2067 = vrot.lane.b32.xlu0 %v1803, 96
    %v2068 = vpop.permute.xlu0 %2067
    %2069 = vrot.lane.b32.xlu0 %v1805, 96
    %v2070 = vpop.permute.xlu0 %2069
    %2071 = vrot.lane.b32.xlu0 %v1807, 96
    %v2072 = vpop.permute.xlu0 %2071
    %2073 = vrot.lane.b32.xlu0 %v1813, 96
    %v2074 = vpop.permute.xlu0 %2073
    %2075 = vrot.lane.b32.xlu0 %v1815, 96
    %v2076 = vpop.permute.xlu0 %2075
    %2077 = vrot.lane.b32.xlu0 %v1817, 96
    %v2078 = vpop.permute.xlu0 %2077
    %2079 = vrot.lane.b32.xlu0 %v1819, 96
    %v2080 = vpop.permute.xlu0 %2079
    %2081 = vrot.lane.b32.xlu0 %v1821, 96
    %v2082 = vpop.permute.xlu0 %2081
    %2083 = vrot.lane.b32.xlu0 %v1823, 96
    %v2084 = vpop.permute.xlu0 %2083
    %2085 = vrot.lane.b32.xlu0 %v1825, 96
    %v2086 = vpop.permute.xlu0 %2085
    %2087 = vrot.lane.b32.xlu0 %v1827, 96
    %v2088 = vpop.permute.xlu0 %2087
    %v2107 = vrot.slane %v1807, 1
    %v2108 = vrot.slane %v1808, 1
    %v2109 = vsel %vm101, %v2107, %v2108
    %v2110 = vrot.slane %v1827, 1
    %v2111 = vrot.slane %v1828, 1
    %v2112 = vsel %vm101, %v2110, %v2111
    %v2129 = vrot.slane %v1807, 2
    %v2130 = vrot.slane %v1808, 2
    %v2131 = vsel %vm684, %v2129, %v2130
    %v2132 = vrot.slane %v1827, 2
    %v2133 = vrot.slane %v1828, 2
    %v2134 = vsel %vm684, %v2132, %v2133
    %2135 = vrot.lane.b32.xlu0 %v1964, 32
    %v2136 = vpop.permute.xlu0 %2135
    %2137 = vrot.lane.b32.xlu0 %v1967, 32
    %v2138 = vpop.permute.xlu0 %2137
    %2139 = vrot.lane.b32.xlu0 %v1970, 32
    %v2140 = vpop.permute.xlu0 %2139
    %2141 = vrot.lane.b32.xlu0 %v1973, 32
    %v2142 = vpop.permute.xlu0 %2141
    %2143 = vrot.lane.b32.xlu0 %v1976, 32
    %v2144 = vpop.permute.xlu0 %2143
    %2145 = vrot.lane.b32.xlu0 %v1979, 32
    %v2146 = vpop.permute.xlu0 %2145
    %2147 = vrot.lane.b32.xlu0 %v1982, 32
    %v2148 = vpop.permute.xlu0 %2147
    %2149 = vrot.lane.b32.xlu0 %v2131, 32
    %v2150 = vpop.permute.xlu0 %2149
    %2151 = vrot.lane.b32.xlu0 %v1988, 32
    %v2152 = vpop.permute.xlu0 %2151
    %2153 = vrot.lane.b32.xlu0 %v1991, 32
    %v2154 = vpop.permute.xlu0 %2153
    %2155 = vrot.lane.b32.xlu0 %v1994, 32
    %v2156 = vpop.permute.xlu0 %2155
    %2157 = vrot.lane.b32.xlu0 %v1997, 32
    %v2158 = vpop.permute.xlu0 %2157
    %2159 = vrot.lane.b32.xlu0 %v2000, 32
    %v2160 = vpop.permute.xlu0 %2159
    %2161 = vrot.lane.b32.xlu0 %v2003, 32
    %v2162 = vpop.permute.xlu0 %2161
    %2163 = vrot.lane.b32.xlu0 %v2006, 32
    %v2164 = vpop.permute.xlu0 %2163
    %2165 = vrot.lane.b32.xlu0 %v2134, 32
    %v2166 = vpop.permute.xlu0 %2165
    %2185 = vrot.lane.b32.xlu0 %v1795, 64
    %v2186 = vpop.permute.xlu0 %2185
    %2187 = vrot.lane.b32.xlu0 %v1797, 64
    %v2188 = vpop.permute.xlu0 %2187
    %2189 = vrot.lane.b32.xlu0 %v1799, 64
    %v2190 = vpop.permute.xlu0 %2189
    %2191 = vrot.lane.b32.xlu0 %v1801, 64
    %v2192 = vpop.permute.xlu0 %2191
    %2193 = vrot.lane.b32.xlu0 %v1803, 64
    %v2194 = vpop.permute.xlu0 %2193
    %2195 = vrot.lane.b32.xlu0 %v1805, 64
    %v2196 = vpop.permute.xlu0 %2195
    %2197 = vrot.lane.b32.xlu0 %v1807, 64
    %v2198 = vpop.permute.xlu0 %2197
    %2199 = vrot.lane.b32.xlu0 %v1809, 64
    %v2200 = vpop.permute.xlu0 %2199
    %2201 = vrot.lane.b32.xlu0 %v1815, 64
    %v2202 = vpop.permute.xlu0 %2201
    %2203 = vrot.lane.b32.xlu0 %v1817, 64
    %v2204 = vpop.permute.xlu0 %2203
    %2205 = vrot.lane.b32.xlu0 %v1819, 64
    %v2206 = vpop.permute.xlu0 %2205
    %2207 = vrot.lane.b32.xlu0 %v1821, 64
    %v2208 = vpop.permute.xlu0 %2207
    %2209 = vrot.lane.b32.xlu0 %v1823, 64
    %v2210 = vpop.permute.xlu0 %2209
    %2211 = vrot.lane.b32.xlu0 %v1825, 64
    %v2212 = vpop.permute.xlu0 %2211
    %2213 = vrot.lane.b32.xlu0 %v1827, 64
    %v2214 = vpop.permute.xlu0 %2213
    %2215 = vrot.lane.b32.xlu0 %v1829, 64
    %v2216 = vpop.permute.xlu0 %2215
    %v2235 = vrot.slane %v1809, 1
    %v2236 = vrot.slane %v1810, 1
    %v2237 = vsel %vm101, %v2235, %v2236
    %v2238 = vrot.slane %v1829, 1
    %v2239 = vrot.slane %v1830, 1
    %v2240 = vsel %vm101, %v2238, %v2239
    %2241 = vrot.lane.b32.xlu0 %v1871, 96
    %v2242 = vpop.permute.xlu0 %2241
    %2243 = vrot.lane.b32.xlu0 %v1874, 96
    %v2244 = vpop.permute.xlu0 %2243
    %2245 = vrot.lane.b32.xlu0 %v1877, 96
    %v2246 = vpop.permute.xlu0 %2245
    %2247 = vrot.lane.b32.xlu0 %v1880, 96
    %v2248 = vpop.permute.xlu0 %2247
    %2249 = vrot.lane.b32.xlu0 %v1883, 96
    %v2250 = vpop.permute.xlu0 %2249
    %2251 = vrot.lane.b32.xlu0 %v1886, 96
    %v2252 = vpop.permute.xlu0 %2251
    %2253 = vrot.lane.b32.xlu0 %v2109, 96
    %v2254 = vpop.permute.xlu0 %2253
    %2255 = vrot.lane.b32.xlu0 %v2237, 96
    %v2256 = vpop.permute.xlu0 %2255
    %2257 = vrot.lane.b32.xlu0 %v1895, 96
    %v2258 = vpop.permute.xlu0 %2257
    %2259 = vrot.lane.b32.xlu0 %v1898, 96
    %v2260 = vpop.permute.xlu0 %2259
    %2261 = vrot.lane.b32.xlu0 %v1901, 96
    %v2262 = vpop.permute.xlu0 %2261
    %2263 = vrot.lane.b32.xlu0 %v1904, 96
    %v2264 = vpop.permute.xlu0 %2263
    %2265 = vrot.lane.b32.xlu0 %v1907, 96
    %v2266 = vpop.permute.xlu0 %2265
    %2267 = vrot.lane.b32.xlu0 %v1910, 96
    %v2268 = vpop.permute.xlu0 %2267
    %2269 = vrot.lane.b32.xlu0 %v2112, 96
    %v2270 = vpop.permute.xlu0 %2269
    %2271 = vrot.lane.b32.xlu0 %v2240, 96
    %v2272 = vpop.permute.xlu0 %2271
    %v2289 = vrot.slane %v1809, 2
    %v2290 = vrot.slane %v1810, 2
    %v2291 = vsel %vm684, %v2289, %v2290
    %v2292 = vrot.slane %v1829, 2
    %v2293 = vrot.slane %v1830, 2
    %v2294 = vsel %vm684, %v2292, %v2293
    %v2295 = vsel %vm304, %v1791, %v1912
    %v2296 = vsel %vm304, %v1793, %v1914
    %v2297 = vsel %vm304, %v1795, %v1916
    %v2298 = vsel %vm304, %v1797, %v1918
    %v2299 = vsel %vm304, %v1799, %v1920
    %v2300 = vsel %vm304, %v1801, %v1922
    %v2301 = vsel %vm304, %v1803, %v1924
    %v2302 = vsel %vm304, %v1805, %v1926
    %v2303 = vsel %vm304, %v1811, %v1928
    %v2304 = vsel %vm304, %v1813, %v1930
    %v2305 = vsel %vm304, %v1815, %v1932
    %v2306 = vsel %vm304, %v1817, %v1934
    %v2307 = vsel %vm304, %v1819, %v1936
    %v2308 = vsel %vm304, %v1821, %v1938
    %v2309 = vsel %vm304, %v1823, %v1940
    %v2310 = vsel %vm304, %v1825, %v1942
    %v2311 = vsel %vm321, %v2295, %v2008
    %v2312 = vsel %vm321, %v2296, %v2010
    %v2313 = vsel %vm321, %v2297, %v2012
    %v2314 = vsel %vm321, %v2298, %v2014
    %v2315 = vsel %vm321, %v2299, %v2016
    %v2316 = vsel %vm321, %v2300, %v2018
    %v2317 = vsel %vm321, %v2301, %v2020
    %v2318 = vsel %vm321, %v2302, %v2022
    %v2319 = vsel %vm321, %v2303, %v2024
    %v2320 = vsel %vm321, %v2304, %v2026
    %v2321 = vsel %vm321, %v2305, %v2028
    %v2322 = vsel %vm321, %v2306, %v2030
    %v2323 = vsel %vm321, %v2307, %v2032
    %v2324 = vsel %vm321, %v2308, %v2034
    %v2325 = vsel %vm321, %v2309, %v2036
    %v2326 = vsel %vm321, %v2310, %v2038
    %v2327 = vsel %vm338, %v2311, %v2058
    %v2328 = vsel %vm338, %v2312, %v2060
    %v2329 = vsel %vm338, %v2313, %v2062
    %v2330 = vsel %vm338, %v2314, %v2064
    %v2331 = vsel %vm338, %v2315, %v2066
    %v2332 = vsel %vm338, %v2316, %v2068
    %v2333 = vsel %vm338, %v2317, %v2070
    %v2334 = vsel %vm338, %v2318, %v2072
    %v2335 = vsel %vm338, %v2319, %v2074
    %v2336 = vsel %vm338, %v2320, %v2076
    %v2337 = vsel %vm338, %v2321, %v2078
    %v2338 = vsel %vm338, %v2322, %v2080
    %v2339 = vsel %vm338, %v2323, %v2082
    %v2340 = vsel %vm338, %v2324, %v2084
    %v2341 = vsel %vm338, %v2325, %v2086
    %v2342 = vsel %vm338, %v2326, %v2088
    %v2343 = vsel %vm304, %v1868, %v2136
    %v2344 = vsel %vm304, %v1871, %v2138
    %v2345 = vsel %vm304, %v1874, %v2140
    %v2346 = vsel %vm304, %v1877, %v2142
    %v2347 = vsel %vm304, %v1880, %v2144
    %v2348 = vsel %vm304, %v1883, %v2146
    %v2349 = vsel %vm304, %v1886, %v2148
    %v2350 = vsel %vm304, %v2109, %v2150
    %v2351 = vsel %vm304, %v1892, %v2152
    %v2352 = vsel %vm304, %v1895, %v2154
    %v2353 = vsel %vm304, %v1898, %v2156
    %v2354 = vsel %vm304, %v1901, %v2158
    %v2355 = vsel %vm304, %v1904, %v2160
    %v2356 = vsel %vm304, %v1907, %v2162
    %v2357 = vsel %vm304, %v1910, %v2164
    %v2358 = vsel %vm304, %v2112, %v2166
    %v2359 = vsel %vm321, %v2343, %v2186
    %v2360 = vsel %vm321, %v2344, %v2188
    %v2361 = vsel %vm321, %v2345, %v2190
    %v2362 = vsel %vm321, %v2346, %v2192
    %v2363 = vsel %vm321, %v2347, %v2194
    %v2364 = vsel %vm321, %v2348, %v2196
    %v2365 = vsel %vm321, %v2349, %v2198
    %v2366 = vsel %vm321, %v2350, %v2200
    %v2367 = vsel %vm321, %v2351, %v2202
    %v2368 = vsel %vm321, %v2352, %v2204
    %v2369 = vsel %vm321, %v2353, %v2206
    %v2370 = vsel %vm321, %v2354, %v2208
    %v2371 = vsel %vm321, %v2355, %v2210
    %v2372 = vsel %vm321, %v2356, %v2212
    %v2373 = vsel %vm321, %v2357, %v2214
    %v2374 = vsel %vm321, %v2358, %v2216
    %v2375 = vsel %vm338, %v2359, %v2242
    %v2376 = vsel %vm338, %v2360, %v2244
    %v2377 = vsel %vm338, %v2361, %v2246
    %v2378 = vsel %vm338, %v2362, %v2248
    %v2379 = vsel %vm338, %v2363, %v2250
    %v2380 = vsel %vm338, %v2364, %v2252
    %v2381 = vsel %vm338, %v2365, %v2254
    %v2382 = vsel %vm338, %v2366, %v2256
    %v2383 = vsel %vm338, %v2367, %v2258
    %v2384 = vsel %vm338, %v2368, %v2260
    %v2385 = vsel %vm338, %v2369, %v2262
    %v2386 = vsel %vm338, %v2370, %v2264
    %v2387 = vsel %vm338, %v2371, %v2266
    %v2388 = vsel %vm338, %v2372, %v2268
    %v2389 = vsel %vm338, %v2373, %v2270
    %v2390 = vsel %vm338, %v2374, %v2272
    %v2391 = vld [vmem:[%s4] sm:$0xff]
    %v2392 = vld [vmem:[%s4 + $0x8] sm:$0xff]
    %v2393 = vld [vmem:[%s4 + $0x10] sm:$0xff]
    %v2394 = vld [vmem:[%s4 + $0x18] sm:$0xff]
    %v2395 = vld [vmem:[%s4 + $0x20] sm:$0xff]
    %v2396 = vld [vmem:[%s4 + $0x28] sm:$0xff]
    %v2397 = vld [vmem:[%s4 + $0x30] sm:$0xff]
    %v2398 = vld [vmem:[%s4 + $0x38] sm:$0xff]
    %v2399 = vld [vmem:[%s4 + $0x40] sm:$0xff]
    %v2400 = vld [vmem:[%s4 + $0x48] sm:$0xff]
    %v2401 = vld [vmem:[%s4 + $0x50] sm:$0xff]
    %v2402 = vld [vmem:[%s4 + $0x58] sm:$0xff]
    %v2403 = vld [vmem:[%s4 + $0x60] sm:$0xff]
    %v2404 = vld [vmem:[%s4 + $0x68] sm:$0xff]
    %v2405 = vld [vmem:[%s4 + $0x70] sm:$0xff]
    %v2406 = vld [vmem:[%s4 + $0x78] sm:$0xff]
    %v2407 = vld [vmem:[%s4 + $0x80] sm:$0xff]
    %v2408 = vld [vmem:[%s4 + $0x88] sm:$0xff]
    %v2409 = vld [vmem:[%s4 + $0x90] sm:$0xff]
    %v2410 = vld [vmem:[%s4 + $0x98] sm:$0xff]
    %v2411 = vld [vmem:[%s4 + $0xa0] sm:$0xff]
    %v2412 = vld [vmem:[%s4 + $0xa8] sm:$0xff]
    %v2413 = vld [vmem:[%s4 + $0xb0] sm:$0xff]
    %v2414 = vld [vmem:[%s4 + $0xb8] sm:$0xff]
    %v2415 = vld [vmem:[%s4 + $0xc0] sm:$0xff]
    %v2416 = vld [vmem:[%s4 + $0xc8] sm:$0xff]
    %v2417 = vld [vmem:[%s4 + $0xd0] sm:$0xff]
    %v2418 = vld [vmem:[%s4 + $0xd8] sm:$0xff]
    %v2419 = vld [vmem:[%s4 + $0xe0] sm:$0xff]
    %v2420 = vld [vmem:[%s4 + $0xe8] sm:$0xff]
    %v2421 = vld [vmem:[%s4 + $0xf0] sm:$0xff]
    %v2422 = vld [vmem:[%s4 + $0xf8] sm:$0xff]
    %v2423 = vld [vmem:[%s4 + $0x100] sm:$0xff]
    %v2424 = vld [vmem:[%s4 + $0x108] sm:$0xff]
    %v2425 = vld [vmem:[%s4 + $0x110] sm:$0xff]
    %v2426 = vld [vmem:[%s4 + $0x118] sm:$0xff]
    %v2427 = vsel %vm304, %v1967, 0
    %v2429 = vsel %vm304, %v1970, 0
    %v2431 = vsel %vm304, %v1973, 0
    %v2433 = vsel %vm304, %v1976, 0
    %v2435 = vsel %vm304, %v1979, 0
    %v2437 = vsel %vm304, %v1982, 0
    %v2439 = vsel %vm304, %v2131, 0
    %v2441 = vsel %vm304, %v2291, 0
    %v2443 = vsel %vm304, %v1991, 0
    %v2445 = vsel %vm304, %v1994, 0
    %v2447 = vsel %vm304, %v1997, 0
    %v2449 = vsel %vm304, %v2000, 0
    %v2451 = vsel %vm304, %v2003, 0
    %v2453 = vsel %vm304, %v2006, 0
    %v2455 = vsel %vm304, %v2134, 0
    %v2457 = vsel %vm304, %v2294, 0
    %2459 = vmatprep.subr.mxu0 0.0
    %2460 = vmatpush1.msra.mxu0 %v2391
    %2461 = vmatprep.subr.mxu0 0.0
    %2462 = vmatpush1.msra.mxu0 %v2392
    %2463 = vmatprep.subr.mxu0 0.0
    %2464 = vmatpush1.msra.mxu0 %v2393
    %2465 = vmatprep.subr.mxu0 0.0
    %2466 = vmatpush1.msra.mxu0 %v2394
    %2467 = vmatprep.subr.mxu0 0.0
    %2468 = vmatpush1.msra.mxu0 %v2395
    %2469 = vmatprep.subr.mxu0 0.0
    %2470 = vmatpush1.msra.mxu0 %v2396
    %2471 = vmatprep.subr.mxu0 0.0
    %2472 = vmatpush1.msra.mxu0 %v2397
    %2473 = vmatprep.subr.mxu0 0.0
    %2474 = vmatpush1.msra.mxu0 %v2398
    %2475 = vmatprep.subr.mxu0 0.0
    %2476 = vmatpush1.msra.mxu0 %v2399
    %2477 = vmatprep.subr.mxu0 0.0
    %2478 = vmatpush1.msra.mxu0 %v2400
    %2479 = vmatprep.subr.mxu0 0.0
    %2480 = vmatpush1.msra.mxu0 %v2401
    %2481 = vmatprep.subr.mxu0 0.0
    %2482 = vmatpush1.msra.mxu0 %v2402
    %2483 = vmatprep.subr.mxu0 0.0
    %2484 = vmatpush1.msra.mxu0 %v2403
    %2485 = vmatprep.subr.mxu0 0.0
    %2486 = vmatpush1.msra.mxu0 %v2404
    %2487 = vmatprep.subr.mxu0 0.0
    %2488 = vmatpush1.msra.mxu0 %v2405
    %2489 = vmatprep.subr.mxu0 0.0
    %2490 = vmatpush1.msra.mxu0 %v2406
    %2491 = vmatprep.subr.mxu0 0.0
    %2492 = vmatpush1.msra.mxu0 %v2407
    %2493 = vmatprep.subr.mxu0 0.0
    %2494 = vmatpush1.msra.mxu0 %v2408
    %2495 = vmatprep.subr.mxu0 0.0
    %2496 = vmatpush1.msra.mxu0 %v2409
    %2497 = vmatprep.subr.mxu0 0.0
    %2498 = vmatpush1.msra.mxu0 %v2410
    %2499 = vmatprep.subr.mxu0 0.0
    %2500 = vmatpush1.msra.mxu0 %v2411
    %2501 = vmatprep.subr.mxu0 0.0
    %2502 = vmatpush1.msra.mxu0 %v2412
    %2503 = vmatprep.subr.mxu0 0.0
    %2504 = vmatpush1.msra.mxu0 %v2413
    %2505 = vmatprep.subr.mxu0 0.0
    %2506 = vmatpush1.msra.mxu0 %v2414
    %2507 = vmatprep.subr.mxu0 0.0
    %2508 = vmatpush1.msra.mxu0 %v2415
    %2509 = vmatprep.subr.mxu0 0.0
    %2510 = vmatpush1.msra.mxu0 %v2416
    %2511 = vmatprep.subr.mxu0 0.0
    %2512 = vmatpush1.msra.mxu0 %v2417
    %2513 = vmatprep.subr.mxu0 0.0
    %2514 = vmatpush1.msra.mxu0 %v2418
    %2515 = vmatprep.subr.mxu0 0.0
    %2516 = vmatpush1.msra.mxu0 %v2419
    %2517 = vmatprep.subr.mxu0 0.0
    %2518 = vmatpush1.msra.mxu0 %v2420
    %2519 = vmatprep.subr.mxu0 0.0
    %2520 = vmatpush1.msra.mxu0 %v2421
    %2521 = vmatprep.subr.mxu0 0.0
    %2522 = vmatpush1.msra.mxu0 %v2422
    %2523 = vmatprep.mubr.f32.mxu0 %v2375
    %2524 = vmatmul.mubr.f32.gmra.mrb[0].mxu0 %v2327
    %v2525 = vpop.f32.mrb[0].mxu0
    %v2526 = vadd.f32 0.0, %v2525
    %v2527 = vpop.f32.mrb[0].mxu0
    %2528 = vmatprep.mubr.f32.mxu0 %v2376
    %2529 = vmatmul.mubr.f32.gmra.mrb[0].mxu0 %v2328
    %v2530 = vpop.f32.mrb[0].mxu0
    %v2531 = vadd.f32 0.0, %v2530
    %v2532 = vpop.f32.mrb[0].mxu0
    %2533 = vmatprep.mubr.f32.mxu0 %v2377
    %2534 = vmatmul.mubr.f32.gmra.mrb[0].mxu0 %v2329
    %v2535 = vpop.f32.mrb[0].mxu0
    %v2536 = vadd.f32 0.0, %v2535
    %v2537 = vpop.f32.mrb[0].mxu0
    %2538 = vmatprep.mubr.f32.mxu0 %v2378
    %2539 = vmatmul.mubr.f32.gmra.mrb[0].mxu0 %v2330
    %v2540 = vpop.f32.mrb[0].mxu0
    %v2541 = vadd.f32 0.0, %v2540
    %v2542 = vpop.f32.mrb[0].mxu0
    %2543 = vmatprep.mubr.f32.mxu0 %v2379
    %2544 = vmatmul.mubr.f32.gmra.mrb[0].mxu0 %v2331
    %v2545 = vpop.f32.mrb[0].mxu0
    %v2546 = vadd.f32 0.0, %v2545
    %v2547 = vpop.f32.mrb[0].mxu0
    %2548 = vmatprep.mubr.f32.mxu0 %v2380
    %2549 = vmatmul.mubr.f32.gmra.mrb[0].mxu0 %v2332
    %v2550 = vpop.f32.mrb[0].mxu0
    %v2551 = vadd.f32 0.0, %v2550
    %v2552 = vpop.f32.mrb[0].mxu0
    %2553 = vmatprep.mubr.f32.mxu0 %v2381
    %2554 = vmatmul.mubr.f32.gmra.mrb[0].mxu0 %v2333
    %v2555 = vpop.f32.mrb[0].mxu0
    %v2556 = vadd.f32 0.0, %v2555
    %v2557 = vpop.f32.mrb[0].mxu0
    %2558 = vmatprep.mubr.f32.mxu0 %v2382
    %2559 = vmatmul.mubr.f32.gmra.mrb[0].mxu0 %v2334
    %v2560 = vpop.f32.mrb[0].mxu0
    %v2561 = vadd.f32 0.0, %v2560
    %v2562 = vpop.f32.mrb[0].mxu0
    %2563 = vmatprep.mubr.f32.mxu0 %v2383
    %2564 = vmatmul.mubr.f32.gmra.mrb[0].mxu0 %v2335
    %v2565 = vpop.f32.mrb[0].mxu0
    %v2566 = vadd.f32 0.0, %v2565
    %v2567 = vpop.f32.mrb[0].mxu0
    %2568 = vmatprep.mubr.f32.mxu0 %v2384
    %2569 = vmatmul.mubr.f32.gmra.mrb[0].mxu0 %v2336
    %v2570 = vpop.f32.mrb[0].mxu0
    %v2571 = vadd.f32 0.0, %v2570
    %v2572 = vpop.f32.mrb[0].mxu0
    %2573 = vmatprep.mubr.f32.mxu0 %v2385
    %2574 = vmatmul.mubr.f32.gmra.mrb[0].mxu0 %v2337
    %v2575 = vpop.f32.mrb[0].mxu0
    %v2576 = vadd.f32 0.0, %v2575
    %v2577 = vpop.f32.mrb[0].mxu0
    %2578 = vmatprep.mubr.f32.mxu0 %v2386
    %2579 = vmatmul.mubr.f32.gmra.mrb[0].mxu0 %v2338
    %v2580 = vpop.f32.mrb[0].mxu0
    %v2581 = vadd.f32 0.0, %v2580
    %v2582 = vpop.f32.mrb[0].mxu0
    %2583 = vmatprep.mubr.f32.mxu0 %v2387
    %2584 = vmatmul.mubr.f32.gmra.mrb[0].mxu0 %v2339
    %v2585 = vpop.f32.mrb[0].mxu0
    %v2586 = vadd.f32 0.0, %v2585
    %v2587 = vpop.f32.mrb[0].mxu0
    %2588 = vmatprep.mubr.f32.mxu0 %v2388
    %2589 = vmatmul.mubr.f32.gmra.mrb[0].mxu0 %v2340
    %v2590 = vpop.f32.mrb[0].mxu0
    %v2591 = vadd.f32 0.0, %v2590
    %v2592 = vpop.f32.mrb[0].mxu0
    %2593 = vmatprep.mubr.f32.mxu0 %v2389
    %2594 = vmatmul.mubr.f32.gmra.mrb[0].mxu0 %v2341
    %v2595 = vpop.f32.mrb[0].mxu0
    %v2596 = vadd.f32 0.0, %v2595
    %v2597 = vpop.f32.mrb[0].mxu0
    %2598 = vmatprep.mubr.f32.mxu0 %v2390
    %2599 = vmatmul.mubr.f32.gmra.mrb[0].mxu0 %v2342
    %v2600 = vpop.f32.mrb[0].mxu0
    %v2601 = vadd.f32 0.0, %v2600
    %v2602 = vpop.f32.mrb[0].mxu0
    %2603 = vdwg.mxu0
    %2604 = vmatprep.subr.mxu0 0.0
    %2605 = vmatpush1.msra.mxu0 %v2423
    %2606 = vmatprep.subr.mxu0 0.0
    %2607 = vmatpush1.msra.mxu0 %v2424
    %2608 = vmatprep.subr.mxu0 0.0
    %2609 = vmatpush1.msra.mxu0 %v2425
    %2610 = vmatprep.subr.mxu0 0.0
    %2611 = vmatpush1.msra.mxu0 %v2426
    %2612 = vmatprep.subr.mxu0 0.0
    %2613 = vmatpush1.msra.mxu0 0.0
    %2614 = vmatprep.subr.mxu0 0.0
    %2615 = vmatpush1.msra.mxu0 0.0
    %2616 = vmatprep.subr.mxu0 0.0
    %2617 = vmatpush1.msra.mxu0 0.0
    %2618 = vmatprep.subr.mxu0 0.0
    %2619 = vmatpush1.msra.mxu0 0.0
    %2620 = vmatprep.subr.mxu0 0.0
    %2621 = vmatpush1.msra.mxu0 0.0
    %2622 = vmatprep.subr.mxu0 0.0
    %2623 = vmatpush1.msra.mxu0 0.0
    %2624 = vmatprep.subr.mxu0 0.0
    %2625 = vmatpush1.msra.mxu0 0.0
    %2626 = vmatprep.subr.mxu0 0.0
    %2627 = vmatpush1.msra.mxu0 0.0
    %2628 = vmatprep.subr.mxu0 0.0
    %2629 = vmatpush1.msra.mxu0 0.0
    %2630 = vmatprep.subr.mxu0 0.0
    %2631 = vmatpush1.msra.mxu0 0.0
    %2632 = vmatprep.subr.mxu0 0.0
    %2633 = vmatpush1.msra.mxu0 0.0
    %2634 = vmatprep.subr.mxu0 0.0
    %2635 = vmatpush1.msra.mxu0 0.0
    %2636 = vmatprep.subr.mxu0 0.0
    %2637 = vmatpush1.msra.mxu0 0.0
    %2638 = vmatprep.subr.mxu0 0.0
    %2639 = vmatpush1.msra.mxu0 0.0
    %2640 = vmatprep.subr.mxu0 0.0
    %2641 = vmatpush1.msra.mxu0 0.0
    %2642 = vmatprep.subr.mxu0 0.0
    %2643 = vmatpush1.msra.mxu0 0.0
    %2644 = vmatprep.subr.mxu0 0.0
    %2645 = vmatpush1.msra.mxu0 0.0
    %2646 = vmatprep.subr.mxu0 0.0
    %2647 = vmatpush1.msra.mxu0 0.0
    %2648 = vmatprep.subr.mxu0 0.0
    %2649 = vmatpush1.msra.mxu0 0.0
    %2650 = vmatprep.subr.mxu0 0.0
    %2651 = vmatpush1.msra.mxu0 0.0
    %2652 = vmatprep.subr.mxu0 0.0
    %2653 = vmatpush1.msra.mxu0 0.0
    %2654 = vmatprep.subr.mxu0 0.0
    %2655 = vmatpush1.msra.mxu0 0.0
    %2656 = vmatprep.subr.mxu0 0.0
    %2657 = vmatpush1.msra.mxu0 0.0
    %2658 = vmatprep.subr.mxu0 0.0
    %2659 = vmatpush1.msra.mxu0 0.0
    %2660 = vmatprep.subr.mxu0 0.0
    %2661 = vmatpush1.msra.mxu0 0.0
    %2662 = vmatprep.subr.mxu0 0.0
    %2663 = vmatpush1.msra.mxu0 0.0
    %2664 = vmatprep.subr.mxu0 0.0
    %2665 = vmatpush1.msra.mxu0 0.0
    %2666 = vmatprep.subr.mxu0 0.0
    %2667 = vmatpush1.msra.mxu0 0.0
    %2668 = vmatprep.mubr.f32.mxu0 0.0
    %2669 = vmatmul.mubr.f32.gmra.mrb[0].mxu0 %v2427
    %v2670 = vpop.f32.mrb[0].mxu0
    %v2671 = vadd.f32 %v2526, %v2670
    %v2672 = vpop.f32.mrb[0].mxu0
    %2673 = vmatprep.mubr.f32.mxu0 0.0
    %2674 = vmatmul.mubr.f32.gmra.mrb[0].mxu0 %v2429
    %v2675 = vpop.f32.mrb[0].mxu0
    %v2676 = vadd.f32 %v2531, %v2675
    %v2677 = vpop.f32.mrb[0].mxu0
    %2678 = vmatprep.mubr.f32.mxu0 0.0
    %2679 = vmatmul.mubr.f32.gmra.mrb[0].mxu0 %v2431
    %v2680 = vpop.f32.mrb[0].mxu0
    %v2681 = vadd.f32 %v2536, %v2680
    %v2682 = vpop.f32.mrb[0].mxu0
    %2683 = vmatprep.mubr.f32.mxu0 0.0
    %2684 = vmatmul.mubr.f32.gmra.mrb[0].mxu0 %v2433
    %v2685 = vpop.f32.mrb[0].mxu0
    %v2686 = vadd.f32 %v2541, %v2685
    %v2687 = vpop.f32.mrb[0].mxu0
    %2688 = vmatprep.mubr.f32.mxu0 0.0
    %2689 = vmatmul.mubr.f32.gmra.mrb[0].mxu0 %v2435
    %v2690 = vpop.f32.mrb[0].mxu0
    %v2691 = vadd.f32 %v2546, %v2690
    %v2692 = vpop.f32.mrb[0].mxu0
    %2693 = vmatprep.mubr.f32.mxu0 0.0
    %2694 = vmatmul.mubr.f32.gmra.mrb[0].mxu0 %v2437
    %v2695 = vpop.f32.mrb[0].mxu0
    %v2696 = vadd.f32 %v2551, %v2695
    %v2697 = vpop.f32.mrb[0].mxu0
    %2698 = vmatprep.mubr.f32.mxu0 0.0
    %2699 = vmatmul.mubr.f32.gmra.mrb[0].mxu0 %v2439
    %v2700 = vpop.f32.mrb[0].mxu0
    %v2701 = vadd.f32 %v2556, %v2700
    %v2702 = vpop.f32.mrb[0].mxu0
    %2703 = vmatprep.mubr.f32.mxu0 0.0
    %2704 = vmatmul.mubr.f32.gmra.mrb[0].mxu0 %v2441
    %v2705 = vpop.f32.mrb[0].mxu0
    %v2706 = vadd.f32 %v2561, %v2705
    %v2707 = vpop.f32.mrb[0].mxu0
    %2708 = vmatprep.mubr.f32.mxu0 0.0
    %2709 = vmatmul.mubr.f32.gmra.mrb[0].mxu0 %v2443
    %v2710 = vpop.f32.mrb[0].mxu0
    %v2711 = vadd.f32 %v2566, %v2710
    %v2712 = vpop.f32.mrb[0].mxu0
    %2713 = vmatprep.mubr.f32.mxu0 0.0
    %2714 = vmatmul.mubr.f32.gmra.mrb[0].mxu0 %v2445
    %v2715 = vpop.f32.mrb[0].mxu0
    %v2716 = vadd.f32 %v2571, %v2715
    %v2717 = vpop.f32.mrb[0].mxu0
    %2718 = vmatprep.mubr.f32.mxu0 0.0
    %2719 = vmatmul.mubr.f32.gmra.mrb[0].mxu0 %v2447
    %v2720 = vpop.f32.mrb[0].mxu0
    %v2721 = vadd.f32 %v2576, %v2720
    %v2722 = vpop.f32.mrb[0].mxu0
    %2723 = vmatprep.mubr.f32.mxu0 0.0
    %2724 = vmatmul.mubr.f32.gmra.mrb[0].mxu0 %v2449
    %v2725 = vpop.f32.mrb[0].mxu0
    %v2726 = vadd.f32 %v2581, %v2725
    %v2727 = vpop.f32.mrb[0].mxu0
    %2728 = vmatprep.mubr.f32.mxu0 0.0
    %2729 = vmatmul.mubr.f32.gmra.mrb[0].mxu0 %v2451
    %v2730 = vpop.f32.mrb[0].mxu0
    %v2731 = vadd.f32 %v2586, %v2730
    %v2732 = vpop.f32.mrb[0].mxu0
    %2733 = vmatprep.mubr.f32.mxu0 0.0
    %2734 = vmatmul.mubr.f32.gmra.mrb[0].mxu0 %v2453
    %v2735 = vpop.f32.mrb[0].mxu0
    %v2736 = vadd.f32 %v2591, %v2735
    %v2737 = vpop.f32.mrb[0].mxu0
    %2738 = vmatprep.mubr.f32.mxu0 0.0
    %2739 = vmatmul.mubr.f32.gmra.mrb[0].mxu0 %v2455
    %v2740 = vpop.f32.mrb[0].mxu0
    %v2741 = vadd.f32 %v2596, %v2740
    %v2742 = vpop.f32.mrb[0].mxu0
    %2743 = vmatprep.mubr.f32.mxu0 0.0
    %2744 = vmatmul.mubr.f32.gmra.mrb[0].mxu0 %v2457
    %v2745 = vpop.f32.mrb[0].mxu0
    %v2746 = vadd.f32 %v2601, %v2745
    %v2747 = vpop.f32.mrb[0].mxu0
    %2748 = vdwg.mxu0
    %v2749 = vld [vmem:[%s7] sm:$0x1]
    %v2751 = vlaneseq
    %v2752 = vshrl.u32 %v2751, 7
    %v2753 = vsub.s32 0, %v2752
    %v2754 = vrot.slane %v2749, %v2753
    %v2756 = vmul.f32 %v2671, %v2754
    %v2757 = vmul.f32 %v2676, %v2754
    %v2758 = vmul.f32 %v2681, %v2754
    %v2759 = vmul.f32 %v2686, %v2754
    %v2760 = vmul.f32 %v2691, %v2754
    %v2761 = vmul.f32 %v2696, %v2754
    %v2762 = vmul.f32 %v2701, %v2754
    %v2763 = vmul.f32 %v2706, %v2754
    %v2764 = vmul.f32 %v2711, %v2754
    %v2765 = vmul.f32 %v2716, %v2754
    %v2766 = vmul.f32 %v2721, %v2754
    %v2767 = vmul.f32 %v2726, %v2754
    %v2768 = vmul.f32 %v2731, %v2754
    %v2769 = vmul.f32 %v2736, %v2754
    %v2770 = vmul.f32 %v2741, %v2754
    %v2771 = vmul.f32 %v2746, %v2754
    %v2772 = vld [vmem:[%s8] sm:$0x1]
    %v2774 = vlaneseq
    %v2775 = vshrl.u32 %v2774, 7
    %v2776 = vsub.s32 0, %v2775
    %v2777 = vrot.slane %v2772, %v2776
    %v2779 = vadd.f32 %v2756, %v2777
    %v2780 = vadd.f32 %v2757, %v2777
    %v2781 = vadd.f32 %v2758, %v2777
    %v2782 = vadd.f32 %v2759, %v2777
    %v2783 = vadd.f32 %v2760, %v2777
    %v2784 = vadd.f32 %v2761, %v2777
    %v2785 = vadd.f32 %v2762, %v2777
    %v2786 = vadd.f32 %v2763, %v2777
    %v2787 = vadd.f32 %v2764, %v2777
    %v2788 = vadd.f32 %v2765, %v2777
    %v2789 = vadd.f32 %v2766, %v2777
    %v2790 = vadd.f32 %v2767, %v2777
    %v2791 = vadd.f32 %v2768, %v2777
    %v2792 = vadd.f32 %v2769, %v2777
    %v2793 = vadd.f32 %v2770, %v2777
    %v2794 = vadd.f32 %v2771, %v2777
    %v2795 = vxor.u32 %v2779, 2147483648
    %v2796 = vxor.u32 %v2780, 2147483648
    %v2797 = vxor.u32 %v2781, 2147483648
    %v2798 = vxor.u32 %v2782, 2147483648
    %v2799 = vxor.u32 %v2783, 2147483648
    %v2800 = vxor.u32 %v2784, 2147483648
    %v2801 = vxor.u32 %v2785, 2147483648
    %v2802 = vxor.u32 %v2786, 2147483648
    %v2803 = vxor.u32 %v2787, 2147483648
    %v2804 = vxor.u32 %v2788, 2147483648
    %v2805 = vxor.u32 %v2789, 2147483648
    %v2806 = vxor.u32 %v2790, 2147483648
    %v2807 = vxor.u32 %v2791, 2147483648
    %v2808 = vxor.u32 %v2792, 2147483648
    %v2809 = vxor.u32 %v2793, 2147483648
    %v2810 = vxor.u32 %v2794, 2147483648
    %v2811 = vmul.f32 %v2795, 1.442695
    %v2812 = vpow.pop %v2811
    %v2813 = vmul.f32 %v2796, 1.442695
    %v2814 = vpow.pop %v2813
    %v2815 = vmul.f32 %v2797, 1.442695
    %v2816 = vpow.pop %v2815
    %v2817 = vmul.f32 %v2798, 1.442695
    %v2818 = vpow.pop %v2817
    %v2819 = vmul.f32 %v2799, 1.442695
    %v2820 = vpow.pop %v2819
    %v2821 = vmul.f32 %v2800, 1.442695
    %v2822 = vpow.pop %v2821
    %v2823 = vmul.f32 %v2801, 1.442695
    %v2824 = vpow.pop %v2823
    %v2825 = vmul.f32 %v2802, 1.442695
    %v2826 = vpow.pop %v2825
    %v2827 = vmul.f32 %v2803, 1.442695
    %v2828 = vpow.pop %v2827
    %v2829 = vmul.f32 %v2804, 1.442695
    %v2830 = vpow.pop %v2829
    %v2831 = vmul.f32 %v2805, 1.442695
    %v2832 = vpow.pop %v2831
    %v2833 = vmul.f32 %v2806, 1.442695
    %v2834 = vpow.pop %v2833
    %v2835 = vmul.f32 %v2807, 1.442695
    %v2836 = vpow.pop %v2835
    %v2837 = vmul.f32 %v2808, 1.442695
    %v2838 = vpow.pop %v2837
    %v2839 = vmul.f32 %v2809, 1.442695
    %v2840 = vpow.pop %v2839
    %v2841 = vmul.f32 %v2810, 1.442695
    %v2842 = vpow.pop %v2841
    %v2843 = vadd.f32 %v2812, 1.0
    %v2844 = vadd.f32 %v2814, 1.0
    %v2845 = vadd.f32 %v2816, 1.0
    %v2846 = vadd.f32 %v2818, 1.0
    %v2847 = vadd.f32 %v2820, 1.0
    %v2848 = vadd.f32 %v2822, 1.0
    %v2849 = vadd.f32 %v2824, 1.0
    %v2850 = vadd.f32 %v2826, 1.0
    %v2851 = vadd.f32 %v2828, 1.0
    %v2852 = vadd.f32 %v2830, 1.0
    %v2853 = vadd.f32 %v2832, 1.0
    %v2854 = vadd.f32 %v2834, 1.0
    %v2855 = vadd.f32 %v2836, 1.0
    %v2856 = vadd.f32 %v2838, 1.0
    %v2857 = vadd.f32 %v2840, 1.0
    %v2858 = vadd.f32 %v2842, 1.0
    %v2859 = vrcp.pop %v2843
    %v2860 = vmul.f32 1.0, %v2859
    %v2861 = vrcp.pop %v2844
    %v2862 = vmul.f32 1.0, %v2861
    %v2863 = vrcp.pop %v2845
    %v2864 = vmul.f32 1.0, %v2863
    %v2865 = vrcp.pop %v2846
    %v2866 = vmul.f32 1.0, %v2865
    %v2867 = vrcp.pop %v2847
    %v2868 = vmul.f32 1.0, %v2867
    %v2869 = vrcp.pop %v2848
    %v2870 = vmul.f32 1.0, %v2869
    %v2871 = vrcp.pop %v2849
    %v2872 = vmul.f32 1.0, %v2871
    %v2873 = vrcp.pop %v2850
    %v2874 = vmul.f32 1.0, %v2873
    %v2875 = vrcp.pop %v2851
    %v2876 = vmul.f32 1.0, %v2875
    %v2877 = vrcp.pop %v2852
    %v2878 = vmul.f32 1.0, %v2877
    %v2879 = vrcp.pop %v2853
    %v2880 = vmul.f32 1.0, %v2879
    %v2881 = vrcp.pop %v2854
    %v2882 = vmul.f32 1.0, %v2881
    %v2883 = vrcp.pop %v2855
    %v2884 = vmul.f32 1.0, %v2883
    %v2885 = vrcp.pop %v2856
    %v2886 = vmul.f32 1.0, %v2885
    %v2887 = vrcp.pop %v2857
    %v2888 = vmul.f32 1.0, %v2887
    %v2889 = vrcp.pop %v2858
    %v2890 = vmul.f32 1.0, %v2889
    %v2891 = vmul.f32 %v2779, %v2860
    %v2892 = vmul.f32 %v2780, %v2862
    %v2893 = vmul.f32 %v2781, %v2864
    %v2894 = vmul.f32 %v2782, %v2866
    %v2895 = vmul.f32 %v2783, %v2868
    %v2896 = vmul.f32 %v2784, %v2870
    %v2897 = vmul.f32 %v2785, %v2872
    %v2898 = vmul.f32 %v2786, %v2874
    %v2899 = vmul.f32 %v2787, %v2876
    %v2900 = vmul.f32 %v2788, %v2878
    %v2901 = vmul.f32 %v2789, %v2880
    %v2902 = vmul.f32 %v2790, %v2882
    %v2903 = vmul.f32 %v2791, %v2884
    %v2904 = vmul.f32 %v2792, %v2886
    %v2905 = vmul.f32 %v2793, %v2888
    %v2906 = vmul.f32 %v2794, %v2890
    %2907 = vst.msk [vmem:[#allocation3] sm:$0xff] %vm1539, %v2891
    %2908 = vst.msk [vmem:[#allocation3 + $0x8] sm:$0xff] %vm1539, %v2892
    %2909 = vst.msk [vmem:[#allocation3 + $0x10] sm:$0xff] %vm1539, %v2893
    %2910 = vst.msk [vmem:[#allocation3 + $0x18] sm:$0xff] %vm1539, %v2894
    %2911 = vst.msk [vmem:[#allocation3 + $0x20] sm:$0xff] %vm1539, %v2895
    %2912 = vst.msk [vmem:[#allocation3 + $0x28] sm:$0xff] %vm1539, %v2896
    %2913 = vst.msk [vmem:[#allocation3 + $0x30] sm:$0xff] %vm1539, %v2897
    %2914 = vst.msk [vmem:[#allocation3 + $0x38] sm:$0xff] %vm1539, %v2898
    %2915 = vst.msk [vmem:[#allocation3 + $0x40] sm:$0xff] %vm1539, %v2899
    %2916 = vst.msk [vmem:[#allocation3 + $0x48] sm:$0xff] %vm1539, %v2900
    %2917 = vst.msk [vmem:[#allocation3 + $0x50] sm:$0xff] %vm1539, %v2901
    %2918 = vst.msk [vmem:[#allocation3 + $0x58] sm:$0xff] %vm1539, %v2902
    %2919 = vst.msk [vmem:[#allocation3 + $0x60] sm:$0xff] %vm1539, %v2903
    %2920 = vst.msk [vmem:[#allocation3 + $0x68] sm:$0xff] %vm1539, %v2904
    %2921 = vst.msk [vmem:[#allocation3 + $0x70] sm:$0xff] %vm1539, %v2905
    %2922 = vst.msk [vmem:[#allocation3 + $0x78] sm:$0xff] %vm1539, %v2906
    // Predicated region
    $region38: #{asdownsample_pallas.1} parent=1 // pred_check
      _
    $region39: #{asdownsample_pallas.1} parent=1 // pred_check_branch
      %2924 = sbr.rel (0) target = $region41
    $region40: #{asdownsample_pallas.1} parent=1 // pred_region
      %s2926 = ssub.s32 2048, 2048
      %2927 = vsyncadd [#allocation4], %s2926
      %s2928 = sshll.u32 [#allocation3], 4
      %s2929 = int_to_ptr.vmem [resolvable:$true] %s2928
      %2934 = dma.vmem_to_hbm [thread:$0]  %s2929, 2048, %s9, [#allocation4], 128, 128, 8
    $region41: #{asdownsample_pallas.1} parent=1 // pred_fallthru
      _
    // Predicated region
    $region42: #{asdownsample_pallas.1} parent=1 // pred_check
      _
    $region43: #{asdownsample_pallas.1} parent=1 // pred_check_branch
      %2936 = sbr.rel (0) target = $region45
    $region44: #{asdownsample_pallas.1} parent=1 // pred_region
      %2937 = dma.done [#allocation4], 2048
    $region45: #{asdownsample_pallas.1} parent=1 // pred_fallthru
      _
    %2938 = vsyncpa [#allocation4], 1

</llo_original>
